<compile_context>
chip_gen: v7x
topology: tpu7x:2x2x1
jax: 0.10.0
libtpu: 0.0.40
codegen_flags: <defaults>
</compile_context>

<pallas_src>
import jax
import jax.numpy as jnp
import numpy as np
from jax.experimental import pallas as pl
from jax.experimental.pallas import tpu as pltpu


def _embeddings_kernel(ids_ref, emb_hbm, pos_ref, out_ref, gbuf, sem):
    # ids_ref : SMEM (B*L,) int32         -- all token ids (scalar prefetch)
    # emb_hbm : HBM  (V, D) f32           -- token embedding table (never copied whole)
    # pos_ref : VMEM (R, D) f32           -- pre-tiled position slab for one tile
    # out_ref : VMEM (R, D) f32           -- output tile (R = BT * L rows)
    # gbuf    : VMEM (R, D) f32 scratch   -- DMA-gather destination
    # sem     : DMA semaphores, shape (R,)
    g = pl.program_id(0)
    R = out_ref.shape[0]
    V = emb_hbm.shape[0]
    row0 = g * R

    def row_copy(r):
        tok = ids_ref[row0 + r]
        # Clamp out-of-range ids: PyTorch nn.Embedding would raise; here we avoid
        # an out-of-bounds HBM DMA instead.
        tok = jnp.clip(tok, 0, V - 1)
        return pltpu.make_async_copy(
            emb_hbm.at[pl.ds(tok, 1), :],
            gbuf.at[pl.ds(r, 1), :],
            sem.at[r],
        )

    # Issue all row gathers, then wait on all (per-row semaphores).
    @pl.loop(0, R, unroll=True)
    def _(r):
        row_copy(r).start()

    @pl.loop(0, R, unroll=True)
    def _(r):
        row_copy(r).wait()

    out_ref[...] = gbuf[...] + pos_ref[...]


def _choose_batch_tile(B, L, target_rows=256):
    """Largest divisor bt of B with bt*L <= target_rows and (bt*L) % 8 == 0,
    keeping >= 2 grid steps when B >= 2 (so v7x megacore has work to shard)."""
    best = None
    max_bt = max(1, target_rows // max(L, 1))
    if B >= 2:
        max_bt = min(max_bt, max(1, B // 2))
    for bt in range(1, min(max_bt, B) + 1):
        if B % bt == 0 and (bt * L) % 8 == 0:
            best = bt
    if best is None:
        best = B  # single full-array block: always a legal block shape
    return best


def embeddings_forward(input_ids, emb_table, pos_table, *, target_rows=256):
    """input_ids: [B, L] int; emb_table: [V, D] f32; pos_table: [L, D] f32 (L == max_length)."""
    B, L = input_ids.shape
    V, D = emb_table.shape
    assert pos_table.shape == (L, D), "input_ids length must equal max_length"

    BT = _choose_batch_tile(B, L, target_rows)
    R = BT * L
    grid = (B // BT,)

    ids_flat = input_ids.reshape(B * L).astype(jnp.int32)              # -> SMEM prefetch
    pos_slab = jnp.tile(pos_table.astype(jnp.float32), (BT, 1))        # (R, D)

    # True traffic: gathered rows in + output out + ids + position slab (not V*D).
    cost = pl.CostEstimate(
        flops=B * L * D,
        transcendentals=0,
        bytes_accessed=2 * B * L * D * 4 + B * L * 4 + R * D * 4,
    )

    out_flat = pl.pallas_call(
        _embeddings_kernel,
        out_shape=jax.ShapeDtypeStruct((B * L, D), jnp.float32),
        grid_spec=pltpu.PrefetchScalarGridSpec(
            num_scalar_prefetch=1,                                     # ids -> SMEM
            grid=grid,
            in_specs=[
                pl.BlockSpec(memory_space=pl.ANY),                     # emb table stays in HBM
                pl.BlockSpec((R, D), lambda g, ids: (0, 0)),           # position slab
            ],
            out_specs=pl.BlockSpec((R, D), lambda g, ids: (g, 0)),
            scratch_shapes=[
                pltpu.VMEM((R, D), jnp.float32),                       # gather buffer
                pltpu.SemaphoreType.DMA((R,)),
            ],
        ),
        compiler_params=pltpu.CompilerParams(
            dimension_semantics=("parallel",),
        ),
        cost_estimate=cost,
    )(ids_flat, emb_table.astype(jnp.float32), pos_slab)

    return out_flat.reshape(B, L, D)


if __name__ == "__main__":
    # Small shapes consistent with the module's forward.
    vocab_size = 32
    embedding_dim = 128
    max_length = 16
    batch = 2

    key = jax.random.PRNGKey(0)
    k_ids, k_emb, k_pos = jax.random.split(key, 3)

    # Deterministic parameter init (nn.Embedding default: N(0, 1)).
    emb_table = jax.random.normal(k_emb, (vocab_size, embedding_dim), dtype=jnp.float32)
    pos_table = jax.random.normal(k_pos, (max_length, embedding_dim), dtype=jnp.float32)

    input_ids = jax.random.randint(k_ids, (batch, max_length), 0, vocab_size, dtype=jnp.int32)

    out = embeddings_forward(input_ids, emb_table, pos_table)
    out = jax.block_until_ready(out)

    # Pure-JAX reference for correctness.
    ref = jnp.take(emb_table, input_ids, axis=0) + pos_table[None, :, :]
    assert out.shape == (batch, max_length, embedding_dim)
    assert np.allclose(np.asarray(out), np.asarray(ref), atol=1e-5), "mismatch vs reference"

    print("KERNEL_OK")
</pallas_src>

<mosaic_0001>
module attributes {stable_mosaic.version = 11 : i64} {
  func.func @_embeddings_kernel(%arg0: i32, %arg1: memref<32xi32, #tpu.memory_space<smem>>, %arg2: memref<32x128xf32, #tpu.memory_space<any>>, %arg3: memref<16x128xf32, #tpu.memory_space<vmem>>, %arg4: memref<16x128xf32, #tpu.memory_space<vmem>>, %arg5: memref<16x128xf32, #tpu.memory_space<vmem>>, %arg6: memref<16x!tpu.dma_semaphore, #tpu.memory_space<semaphore_mem>>) attributes {dimension_semantics = [#tpu.dimension_semantics<parallel>], iteration_bounds = array<i64: 2>, scalar_prefetch = 1 : i64, scratch_operands = 2 : i64, tpu.core_type = #tpu.core_type<tc>, window_params = [{}, {pipeline_mode = #tpu.pipeline_mode<synchronous>, transform_indices = @transform_1, window_bounds = array<i64: 16, 128>}, {transform_indices = @transform_2, window_bounds = array<i64: 16, 128>}]} {
    %c16_i32 = arith.constant 16 : i32
    %0 = arith.muli %arg0, %c16_i32 : i32
    %c0_i32 = arith.constant 0 : i32
    %c1_i32 = arith.constant 1 : i32
    %1 = arith.muli %c0_i32, %c1_i32 : i32
    %c0_i32_0 = arith.constant 0 : i32
    %2 = arith.addi %c0_i32_0, %1 : i32
    %3 = arith.addi %0, %2 : i32
    %4 = arith.index_cast %3 : i32 to index
    %5 = memref.load %arg1[%4] : memref<32xi32, #tpu.memory_space<smem>>
    %c0_i32_1 = arith.constant 0 : i32
    %c31_i32 = arith.constant 31 : i32
    %6 = arith.maxsi %c0_i32_1, %5 : i32
    %7 = arith.minsi %c31_i32, %6 : i32
    %c0_i32_2 = arith.constant 0 : i32
    %8 = tpu.memref_slice %arg2[%7, %c0_i32_2] : memref<32x128xf32, #tpu.memory_space<any>> -> memref<1x128xf32, #tpu.memory_space<any>>
    %c0_i32_3 = arith.constant 0 : i32
    %9 = tpu.memref_slice %arg5[%2, %c0_i32_3] : memref<16x128xf32, #tpu.memory_space<vmem>> -> memref<1x128xf32, #tpu.memory_space<vmem>>
    %10 = tpu.memref_slice %arg6[%2] : memref<16x!tpu.dma_semaphore, #tpu.memory_space<semaphore_mem>> -> memref<1x!tpu.dma_semaphore, #tpu.memory_space<semaphore_mem>>
    %11 = tpu.memref_squeeze %10 : memref<1x!tpu.dma_semaphore, #tpu.memory_space<semaphore_mem>> -> memref<!tpu.dma_semaphore, #tpu.memory_space<semaphore_mem>>
    tpu.enqueue_dma source(%8 : memref<1x128xf32, #tpu.memory_space<any>>) target(%9 : memref<1x128xf32, #tpu.memory_space<vmem>>) target_semaphore(%11 : memref<!tpu.dma_semaphore, #tpu.memory_space<semaphore_mem>>)
    %c1_i32_4 = arith.constant 1 : i32
    %c1_i32_5 = arith.constant 1 : i32
    %12 = arith.muli %c1_i32_4, %c1_i32_5 : i32
    %c0_i32_6 = arith.constant 0 : i32
    %13 = arith.addi %c0_i32_6, %12 : i32
    %14 = arith.addi %0, %13 : i32
    %15 = arith.index_cast %14 : i32 to index
    %16 = memref.load %arg1[%15] : memref<32xi32, #tpu.memory_space<smem>>
    %c0_i32_7 = arith.constant 0 : i32
    %c31_i32_8 = arith.constant 31 : i32
    %17 = arith.maxsi %c0_i32_7, %16 : i32
    %18 = arith.minsi %c31_i32_8, %17 : i32
    %c0_i32_9 = arith.constant 0 : i32
    %19 = tpu.memref_slice %arg2[%18, %c0_i32_9] : memref<32x128xf32, #tpu.memory_space<any>> -> memref<1x128xf32, #tpu.memory_space<any>>
    %c0_i32_10 = arith.constant 0 : i32
    %20 = tpu.memref_slice %arg5[%13, %c0_i32_10] : memref<16x128xf32, #tpu.memory_space<vmem>> -> memref<1x128xf32, #tpu.memory_space<vmem>>
    %21 = tpu.memref_slice %arg6[%13] : memref<16x!tpu.dma_semaphore, #tpu.memory_space<semaphore_mem>> -> memref<1x!tpu.dma_semaphore, #tpu.memory_space<semaphore_mem>>
    %22 = tpu.memref_squeeze %21 : memref<1x!tpu.dma_semaphore, #tpu.memory_space<semaphore_mem>> -> memref<!tpu.dma_semaphore, #tpu.memory_space<semaphore_mem>>
    tpu.enqueue_dma source(%19 : memref<1x128xf32, #tpu.memory_space<any>>) target(%20 : memref<1x128xf32, #tpu.memory_space<vmem>>) target_semaphore(%22 : memref<!tpu.dma_semaphore, #tpu.memory_space<semaphore_mem>>)
    %c2_i32 = arith.constant 2 : i32
    %c1_i32_11 = arith.constant 1 : i32
    %23 = arith.muli %c2_i32, %c1_i32_11 : i32
    %c0_i32_12 = arith.constant 0 : i32
    %24 = arith.addi %c0_i32_12, %23 : i32
    %25 = arith.addi %0, %24 : i32
    %26 = arith.index_cast %25 : i32 to index
    %27 = memref.load %arg1[%26] : memref<32xi32, #tpu.memory_space<smem>>
    %c0_i32_13 = arith.constant 0 : i32
    %c31_i32_14 = arith.constant 31 : i32
    %28 = arith.maxsi %c0_i32_13, %27 : i32
    %29 = arith.minsi %c31_i32_14, %28 : i32
    %c0_i32_15 = arith.constant 0 : i32
    %30 = tpu.memref_slice %arg2[%29, %c0_i32_15] : memref<32x128xf32, #tpu.memory_space<any>> -> memref<1x128xf32, #tpu.memory_space<any>>
    %c0_i32_16 = arith.constant 0 : i32
    %31 = tpu.memref_slice %arg5[%24, %c0_i32_16] : memref<16x128xf32, #tpu.memory_space<vmem>> -> memref<1x128xf32, #tpu.memory_space<vmem>>
    %32 = tpu.memref_slice %arg6[%24] : memref<16x!tpu.dma_semaphore, #tpu.memory_space<semaphore_mem>> -> memref<1x!tpu.dma_semaphore, #tpu.memory_space<semaphore_mem>>
    %33 = tpu.memref_squeeze %32 : memref<1x!tpu.dma_semaphore, #tpu.memory_space<semaphore_mem>> -> memref<!tpu.dma_semaphore, #tpu.memory_space<semaphore_mem>>
    tpu.enqueue_dma source(%30 : memref<1x128xf32, #tpu.memory_space<any>>) target(%31 : memref<1x128xf32, #tpu.memory_space<vmem>>) target_semaphore(%33 : memref<!tpu.dma_semaphore, #tpu.memory_space<semaphore_mem>>)
    %c3_i32 = arith.constant 3 : i32
    %c1_i32_17 = arith.constant 1 : i32
    %34 = arith.muli %c3_i32, %c1_i32_17 : i32
    %c0_i32_18 = arith.constant 0 : i32
    %35 = arith.addi %c0_i32_18, %34 : i32
    %36 = arith.addi %0, %35 : i32
    %37 = arith.index_cast %36 : i32 to index
    %38 = memref.load %arg1[%37] : memref<32xi32, #tpu.memory_space<smem>>
    %c0_i32_19 = arith.constant 0 : i32
    %c31_i32_20 = arith.constant 31 : i32
    %39 = arith.maxsi %c0_i32_19, %38 : i32
    %40 = arith.minsi %c31_i32_20, %39 : i32
    %c0_i32_21 = arith.constant 0 : i32
    %41 = tpu.memref_slice %arg2[%40, %c0_i32_21] : memref<32x128xf32, #tpu.memory_space<any>> -> memref<1x128xf32, #tpu.memory_space<any>>
    %c0_i32_22 = arith.constant 0 : i32
    %42 = tpu.memref_slice %arg5[%35, %c0_i32_22] : memref<16x128xf32, #tpu.memory_space<vmem>> -> memref<1x128xf32, #tpu.memory_space<vmem>>
    %43 = tpu.memref_slice %arg6[%35] : memref<16x!tpu.dma_semaphore, #tpu.memory_space<semaphore_mem>> -> memref<1x!tpu.dma_semaphore, #tpu.memory_space<semaphore_mem>>
    %44 = tpu.memref_squeeze %43 : memref<1x!tpu.dma_semaphore, #tpu.memory_space<semaphore_mem>> -> memref<!tpu.dma_semaphore, #tpu.memory_space<semaphore_mem>>
    tpu.enqueue_dma source(%41 : memref<1x128xf32, #tpu.memory_space<any>>) target(%42 : memref<1x128xf32, #tpu.memory_space<vmem>>) target_semaphore(%44 : memref<!tpu.dma_semaphore, #tpu.memory_space<semaphore_mem>>)
    %c4_i32 = arith.constant 4 : i32
    %c1_i32_23 = arith.constant 1 : i32
    %45 = arith.muli %c4_i32, %c1_i32_23 : i32
    %c0_i32_24 = arith.constant 0 : i32
    %46 = arith.addi %c0_i32_24, %45 : i32
    %47 = arith.addi %0, %46 : i32
    %48 = arith.index_cast %47 : i32 to index
    %49 = memref.load %arg1[%48] : memref<32xi32, #tpu.memory_space<smem>>
    %c0_i32_25 = arith.constant 0 : i32
    %c31_i32_26 = arith.constant 31 : i32
    %50 = arith.maxsi %c0_i32_25, %49 : i32
    %51 = arith.minsi %c31_i32_26, %50 : i32
    %c0_i32_27 = arith.constant 0 : i32
    %52 = tpu.memref_slice %arg2[%51, %c0_i32_27] : memref<32x128xf32, #tpu.memory_space<any>> -> memref<1x128xf32, #tpu.memory_space<any>>
    %c0_i32_28 = arith.constant 0 : i32
    %53 = tpu.memref_slice %arg5[%46, %c0_i32_28] : memref<16x128xf32, #tpu.memory_space<vmem>> -> memref<1x128xf32, #tpu.memory_space<vmem>>
    %54 = tpu.memref_slice %arg6[%46] : memref<16x!tpu.dma_semaphore, #tpu.memory_space<semaphore_mem>> -> memref<1x!tpu.dma_semaphore, #tpu.memory_space<semaphore_mem>>
    %55 = tpu.memref_squeeze %54 : memref<1x!tpu.dma_semaphore, #tpu.memory_space<semaphore_mem>> -> memref<!tpu.dma_semaphore, #tpu.memory_space<semaphore_mem>>
    tpu.enqueue_dma source(%52 : memref<1x128xf32, #tpu.memory_space<any>>) target(%53 : memref<1x128xf32, #tpu.memory_space<vmem>>) target_semaphore(%55 : memref<!tpu.dma_semaphore, #tpu.memory_space<semaphore_mem>>)
    %c5_i32 = arith.constant 5 : i32
    %c1_i32_29 = arith.constant 1 : i32
    %56 = arith.muli %c5_i32, %c1_i32_29 : i32
    %c0_i32_30 = arith.constant 0 : i32
    %57 = arith.addi %c0_i32_30, %56 : i32
    %58 = arith.addi %0, %57 : i32
    %59 = arith.index_cast %58 : i32 to index
    %60 = memref.load %arg1[%59] : memref<32xi32, #tpu.memory_space<smem>>
    %c0_i32_31 = arith.constant 0 : i32
    %c31_i32_32 = arith.constant 31 : i32
    %61 = arith.maxsi %c0_i32_31, %60 : i32
    %62 = arith.minsi %c31_i32_32, %61 : i32
    %c0_i32_33 = arith.constant 0 : i32
    %63 = tpu.memref_slice %arg2[%62, %c0_i32_33] : memref<32x128xf32, #tpu.memory_space<any>> -> memref<1x128xf32, #tpu.memory_space<any>>
    %c0_i32_34 = arith.constant 0 : i32
    %64 = tpu.memref_slice %arg5[%57, %c0_i32_34] : memref<16x128xf32, #tpu.memory_space<vmem>> -> memref<1x128xf32, #tpu.memory_space<vmem>>
    %65 = tpu.memref_slice %arg6[%57] : memref<16x!tpu.dma_semaphore, #tpu.memory_space<semaphore_mem>> -> memref<1x!tpu.dma_semaphore, #tpu.memory_space<semaphore_mem>>
    %66 = tpu.memref_squeeze %65 : memref<1x!tpu.dma_semaphore, #tpu.memory_space<semaphore_mem>> -> memref<!tpu.dma_semaphore, #tpu.memory_space<semaphore_mem>>
    tpu.enqueue_dma source(%63 : memref<1x128xf32, #tpu.memory_space<any>>) target(%64 : memref<1x128xf32, #tpu.memory_space<vmem>>) target_semaphore(%66 : memref<!tpu.dma_semaphore, #tpu.memory_space<semaphore_mem>>)
    %c6_i32 = arith.constant 6 : i32
    %c1_i32_35 = arith.constant 1 : i32
    %67 = arith.muli %c6_i32, %c1_i32_35 : i32
    %c0_i32_36 = arith.constant 0 : i32
    %68 = arith.addi %c0_i32_36, %67 : i32
    %69 = arith.addi %0, %68 : i32
    %70 = arith.index_cast %69 : i32 to index
    %71 = memref.load %arg1[%70] : memref<32xi32, #tpu.memory_space<smem>>
    %c0_i32_37 = arith.constant 0 : i32
    %c31_i32_38 = arith.constant 31 : i32
    %72 = arith.maxsi %c0_i32_37, %71 : i32
    %73 = arith.minsi %c31_i32_38, %72 : i32
    %c0_i32_39 = arith.constant 0 : i32
    %74 = tpu.memref_slice %arg2[%73, %c0_i32_39] : memref<32x128xf32, #tpu.memory_space<any>> -> memref<1x128xf32, #tpu.memory_space<any>>
    %c0_i32_40 = arith.constant 0 : i32
    %75 = tpu.memref_slice %arg5[%68, %c0_i32_40] : memref<16x128xf32, #tpu.memory_space<vmem>> -> memref<1x128xf32, #tpu.memory_space<vmem>>
    %76 = tpu.memref_slice %arg6[%68] : memref<16x!tpu.dma_semaphore, #tpu.memory_space<semaphore_mem>> -> memref<1x!tpu.dma_semaphore, #tpu.memory_space<semaphore_mem>>
    %77 = tpu.memref_squeeze %76 : memref<1x!tpu.dma_semaphore, #tpu.memory_space<semaphore_mem>> -> memref<!tpu.dma_semaphore, #tpu.memory_space<semaphore_mem>>
    tpu.enqueue_dma source(%74 : memref<1x128xf32, #tpu.memory_space<any>>) target(%75 : memref<1x128xf32, #tpu.memory_space<vmem>>) target_semaphore(%77 : memref<!tpu.dma_semaphore, #tpu.memory_space<semaphore_mem>>)
    %c7_i32 = arith.constant 7 : i32
    %c1_i32_41 = arith.constant 1 : i32
    %78 = arith.muli %c7_i32, %c1_i32_41 : i32
    %c0_i32_42 = arith.constant 0 : i32
    %79 = arith.addi %c0_i32_42, %78 : i32
    %80 = arith.addi %0, %79 : i32
    %81 = arith.index_cast %80 : i32 to index
    %82 = memref.load %arg1[%81] : memref<32xi32, #tpu.memory_space<smem>>
    %c0_i32_43 = arith.constant 0 : i32
    %c31_i32_44 = arith.constant 31 : i32
    %83 = arith.maxsi %c0_i32_43, %82 : i32
    %84 = arith.minsi %c31_i32_44, %83 : i32
    %c0_i32_45 = arith.constant 0 : i32
    %85 = tpu.memref_slice %arg2[%84, %c0_i32_45] : memref<32x128xf32, #tpu.memory_space<any>> -> memref<1x128xf32, #tpu.memory_space<any>>
    %c0_i32_46 = arith.constant 0 : i32
    %86 = tpu.memref_slice %arg5[%79, %c0_i32_46] : memref<16x128xf32, #tpu.memory_space<vmem>> -> memref<1x128xf32, #tpu.memory_space<vmem>>
    %87 = tpu.memref_slice %arg6[%79] : memref<16x!tpu.dma_semaphore, #tpu.memory_space<semaphore_mem>> -> memref<1x!tpu.dma_semaphore, #tpu.memory_space<semaphore_mem>>
    %88 = tpu.memref_squeeze %87 : memref<1x!tpu.dma_semaphore, #tpu.memory_space<semaphore_mem>> -> memref<!tpu.dma_semaphore, #tpu.memory_space<semaphore_mem>>
    tpu.enqueue_dma source(%85 : memref<1x128xf32, #tpu.memory_space<any>>) target(%86 : memref<1x128xf32, #tpu.memory_space<vmem>>) target_semaphore(%88 : memref<!tpu.dma_semaphore, #tpu.memory_space<semaphore_mem>>)
    %c8_i32 = arith.constant 8 : i32
    %c1_i32_47 = arith.constant 1 : i32
    %89 = arith.muli %c8_i32, %c1_i32_47 : i32
    %c0_i32_48 = arith.constant 0 : i32
    %90 = arith.addi %c0_i32_48, %89 : i32
    %91 = arith.addi %0, %90 : i32
    %92 = arith.index_cast %91 : i32 to index
    %93 = memref.load %arg1[%92] : memref<32xi32, #tpu.memory_space<smem>>
    %c0_i32_49 = arith.constant 0 : i32
    %c31_i32_50 = arith.constant 31 : i32
    %94 = arith.maxsi %c0_i32_49, %93 : i32
    %95 = arith.minsi %c31_i32_50, %94 : i32
    %c0_i32_51 = arith.constant 0 : i32
    %96 = tpu.memref_slice %arg2[%95, %c0_i32_51] : memref<32x128xf32, #tpu.memory_space<any>> -> memref<1x128xf32, #tpu.memory_space<any>>
    %c0_i32_52 = arith.constant 0 : i32
    %97 = tpu.memref_slice %arg5[%90, %c0_i32_52] : memref<16x128xf32, #tpu.memory_space<vmem>> -> memref<1x128xf32, #tpu.memory_space<vmem>>
    %98 = tpu.memref_slice %arg6[%90] : memref<16x!tpu.dma_semaphore, #tpu.memory_space<semaphore_mem>> -> memref<1x!tpu.dma_semaphore, #tpu.memory_space<semaphore_mem>>
    %99 = tpu.memref_squeeze %98 : memref<1x!tpu.dma_semaphore, #tpu.memory_space<semaphore_mem>> -> memref<!tpu.dma_semaphore, #tpu.memory_space<semaphore_mem>>
    tpu.enqueue_dma source(%96 : memref<1x128xf32, #tpu.memory_space<any>>) target(%97 : memref<1x128xf32, #tpu.memory_space<vmem>>) target_semaphore(%99 : memref<!tpu.dma_semaphore, #tpu.memory_space<semaphore_mem>>)
    %c9_i32 = arith.constant 9 : i32
    %c1_i32_53 = arith.constant 1 : i32
    %100 = arith.muli %c9_i32, %c1_i32_53 : i32
    %c0_i32_54 = arith.constant 0 : i32
    %101 = arith.addi %c0_i32_54, %100 : i32
    %102 = arith.addi %0, %101 : i32
    %103 = arith.index_cast %102 : i32 to index
    %104 = memref.load %arg1[%103] : memref<32xi32, #tpu.memory_space<smem>>
    %c0_i32_55 = arith.constant 0 : i32
    %c31_i32_56 = arith.constant 31 : i32
    %105 = arith.maxsi %c0_i32_55, %104 : i32
    %106 = arith.minsi %c31_i32_56, %105 : i32
    %c0_i32_57 = arith.constant 0 : i32
    %107 = tpu.memref_slice %arg2[%106, %c0_i32_57] : memref<32x128xf32, #tpu.memory_space<any>> -> memref<1x128xf32, #tpu.memory_space<any>>
    %c0_i32_58 = arith.constant 0 : i32
    %108 = tpu.memref_slice %arg5[%101, %c0_i32_58] : memref<16x128xf32, #tpu.memory_space<vmem>> -> memref<1x128xf32, #tpu.memory_space<vmem>>
    %109 = tpu.memref_slice %arg6[%101] : memref<16x!tpu.dma_semaphore, #tpu.memory_space<semaphore_mem>> -> memref<1x!tpu.dma_semaphore, #tpu.memory_space<semaphore_mem>>
    %110 = tpu.memref_squeeze %109 : memref<1x!tpu.dma_semaphore, #tpu.memory_space<semaphore_mem>> -> memref<!tpu.dma_semaphore, #tpu.memory_space<semaphore_mem>>
    tpu.enqueue_dma source(%107 : memref<1x128xf32, #tpu.memory_space<any>>) target(%108 : memref<1x128xf32, #tpu.memory_space<vmem>>) target_semaphore(%110 : memref<!tpu.dma_semaphore, #tpu.memory_space<semaphore_mem>>)
    %c10_i32 = arith.constant 10 : i32
    %c1_i32_59 = arith.constant 1 : i32
    %111 = arith.muli %c10_i32, %c1_i32_59 : i32
    %c0_i32_60 = arith.constant 0 : i32
    %112 = arith.addi %c0_i32_60, %111 : i32
    %113 = arith.addi %0, %112 : i32
    %114 = arith.index_cast %113 : i32 to index
    %115 = memref.load %arg1[%114] : memref<32xi32, #tpu.memory_space<smem>>
    %c0_i32_61 = arith.constant 0 : i32
    %c31_i32_62 = arith.constant 31 : i32
    %116 = arith.maxsi %c0_i32_61, %115 : i32
    %117 = arith.minsi %c31_i32_62, %116 : i32
    %c0_i32_63 = arith.constant 0 : i32
    %118 = tpu.memref_slice %arg2[%117, %c0_i32_63] : memref<32x128xf32, #tpu.memory_space<any>> -> memref<1x128xf32, #tpu.memory_space<any>>
    %c0_i32_64 = arith.constant 0 : i32
    %119 = tpu.memref_slice %arg5[%112, %c0_i32_64] : memref<16x128xf32, #tpu.memory_space<vmem>> -> memref<1x128xf32, #tpu.memory_space<vmem>>
    %120 = tpu.memref_slice %arg6[%112] : memref<16x!tpu.dma_semaphore, #tpu.memory_space<semaphore_mem>> -> memref<1x!tpu.dma_semaphore, #tpu.memory_space<semaphore_mem>>
    %121 = tpu.memref_squeeze %120 : memref<1x!tpu.dma_semaphore, #tpu.memory_space<semaphore_mem>> -> memref<!tpu.dma_semaphore, #tpu.memory_space<semaphore_mem>>
    tpu.enqueue_dma source(%118 : memref<1x128xf32, #tpu.memory_space<any>>) target(%119 : memref<1x128xf32, #tpu.memory_space<vmem>>) target_semaphore(%121 : memref<!tpu.dma_semaphore, #tpu.memory_space<semaphore_mem>>)
    %c11_i32 = arith.constant 11 : i32
    %c1_i32_65 = arith.constant 1 : i32
    %122 = arith.muli %c11_i32, %c1_i32_65 : i32
    %c0_i32_66 = arith.constant 0 : i32
    %123 = arith.addi %c0_i32_66, %122 : i32
    %124 = arith.addi %0, %123 : i32
    %125 = arith.index_cast %124 : i32 to index
    %126 = memref.load %arg1[%125] : memref<32xi32, #tpu.memory_space<smem>>
    %c0_i32_67 = arith.constant 0 : i32
    %c31_i32_68 = arith.constant 31 : i32
    %127 = arith.maxsi %c0_i32_67, %126 : i32
    %128 = arith.minsi %c31_i32_68, %127 : i32
    %c0_i32_69 = arith.constant 0 : i32
    %129 = tpu.memref_slice %arg2[%128, %c0_i32_69] : memref<32x128xf32, #tpu.memory_space<any>> -> memref<1x128xf32, #tpu.memory_space<any>>
    %c0_i32_70 = arith.constant 0 : i32
    %130 = tpu.memref_slice %arg5[%123, %c0_i32_70] : memref<16x128xf32, #tpu.memory_space<vmem>> -> memref<1x128xf32, #tpu.memory_space<vmem>>
    %131 = tpu.memref_slice %arg6[%123] : memref<16x!tpu.dma_semaphore, #tpu.memory_space<semaphore_mem>> -> memref<1x!tpu.dma_semaphore, #tpu.memory_space<semaphore_mem>>
    %132 = tpu.memref_squeeze %131 : memref<1x!tpu.dma_semaphore, #tpu.memory_space<semaphore_mem>> -> memref<!tpu.dma_semaphore, #tpu.memory_space<semaphore_mem>>
    tpu.enqueue_dma source(%129 : memref<1x128xf32, #tpu.memory_space<any>>) target(%130 : memref<1x128xf32, #tpu.memory_space<vmem>>) target_semaphore(%132 : memref<!tpu.dma_semaphore, #tpu.memory_space<semaphore_mem>>)
    %c12_i32 = arith.constant 12 : i32
    %c1_i32_71 = arith.constant 1 : i32
    %133 = arith.muli %c12_i32, %c1_i32_71 : i32
    %c0_i32_72 = arith.constant 0 : i32
    %134 = arith.addi %c0_i32_72, %133 : i32
    %135 = arith.addi %0, %134 : i32
    %136 = arith.index_cast %135 : i32 to index
    %137 = memref.load %arg1[%136] : memref<32xi32, #tpu.memory_space<smem>>
    %c0_i32_73 = arith.constant 0 : i32
    %c31_i32_74 = arith.constant 31 : i32
    %138 = arith.maxsi %c0_i32_73, %137 : i32
    %139 = arith.minsi %c31_i32_74, %138 : i32
    %c0_i32_75 = arith.constant 0 : i32
    %140 = tpu.memref_slice %arg2[%139, %c0_i32_75] : memref<32x128xf32, #tpu.memory_space<any>> -> memref<1x128xf32, #tpu.memory_space<any>>
    %c0_i32_76 = arith.constant 0 : i32
    %141 = tpu.memref_slice %arg5[%134, %c0_i32_76] : memref<16x128xf32, #tpu.memory_space<vmem>> -> memref<1x128xf32, #tpu.memory_space<vmem>>
    %142 = tpu.memref_slice %arg6[%134] : memref<16x!tpu.dma_semaphore, #tpu.memory_space<semaphore_mem>> -> memref<1x!tpu.dma_semaphore, #tpu.memory_space<semaphore_mem>>
    %143 = tpu.memref_squeeze %142 : memref<1x!tpu.dma_semaphore, #tpu.memory_space<semaphore_mem>> -> memref<!tpu.dma_semaphore, #tpu.memory_space<semaphore_mem>>
    tpu.enqueue_dma source(%140 : memref<1x128xf32, #tpu.memory_space<any>>) target(%141 : memref<1x128xf32, #tpu.memory_space<vmem>>) target_semaphore(%143 : memref<!tpu.dma_semaphore, #tpu.memory_space<semaphore_mem>>)
    %c13_i32 = arith.constant 13 : i32
    %c1_i32_77 = arith.constant 1 : i32
    %144 = arith.muli %c13_i32, %c1_i32_77 : i32
    %c0_i32_78 = arith.constant 0 : i32
    %145 = arith.addi %c0_i32_78, %144 : i32
    %146 = arith.addi %0, %145 : i32
    %147 = arith.index_cast %146 : i32 to index
    %148 = memref.load %arg1[%147] : memref<32xi32, #tpu.memory_space<smem>>
    %c0_i32_79 = arith.constant 0 : i32
    %c31_i32_80 = arith.constant 31 : i32
    %149 = arith.maxsi %c0_i32_79, %148 : i32
    %150 = arith.minsi %c31_i32_80, %149 : i32
    %c0_i32_81 = arith.constant 0 : i32
    %151 = tpu.memref_slice %arg2[%150, %c0_i32_81] : memref<32x128xf32, #tpu.memory_space<any>> -> memref<1x128xf32, #tpu.memory_space<any>>
    %c0_i32_82 = arith.constant 0 : i32
    %152 = tpu.memref_slice %arg5[%145, %c0_i32_82] : memref<16x128xf32, #tpu.memory_space<vmem>> -> memref<1x128xf32, #tpu.memory_space<vmem>>
    %153 = tpu.memref_slice %arg6[%145] : memref<16x!tpu.dma_semaphore, #tpu.memory_space<semaphore_mem>> -> memref<1x!tpu.dma_semaphore, #tpu.memory_space<semaphore_mem>>
    %154 = tpu.memref_squeeze %153 : memref<1x!tpu.dma_semaphore, #tpu.memory_space<semaphore_mem>> -> memref<!tpu.dma_semaphore, #tpu.memory_space<semaphore_mem>>
    tpu.enqueue_dma source(%151 : memref<1x128xf32, #tpu.memory_space<any>>) target(%152 : memref<1x128xf32, #tpu.memory_space<vmem>>) target_semaphore(%154 : memref<!tpu.dma_semaphore, #tpu.memory_space<semaphore_mem>>)
    %c14_i32 = arith.constant 14 : i32
    %c1_i32_83 = arith.constant 1 : i32
    %155 = arith.muli %c14_i32, %c1_i32_83 : i32
    %c0_i32_84 = arith.constant 0 : i32
    %156 = arith.addi %c0_i32_84, %155 : i32
    %157 = arith.addi %0, %156 : i32
    %158 = arith.index_cast %157 : i32 to index
    %159 = memref.load %arg1[%158] : memref<32xi32, #tpu.memory_space<smem>>
    %c0_i32_85 = arith.constant 0 : i32
    %c31_i32_86 = arith.constant 31 : i32
    %160 = arith.maxsi %c0_i32_85, %159 : i32
    %161 = arith.minsi %c31_i32_86, %160 : i32
    %c0_i32_87 = arith.constant 0 : i32
    %162 = tpu.memref_slice %arg2[%161, %c0_i32_87] : memref<32x128xf32, #tpu.memory_space<any>> -> memref<1x128xf32, #tpu.memory_space<any>>
    %c0_i32_88 = arith.constant 0 : i32
    %163 = tpu.memref_slice %arg5[%156, %c0_i32_88] : memref<16x128xf32, #tpu.memory_space<vmem>> -> memref<1x128xf32, #tpu.memory_space<vmem>>
    %164 = tpu.memref_slice %arg6[%156] : memref<16x!tpu.dma_semaphore, #tpu.memory_space<semaphore_mem>> -> memref<1x!tpu.dma_semaphore, #tpu.memory_space<semaphore_mem>>
    %165 = tpu.memref_squeeze %164 : memref<1x!tpu.dma_semaphore, #tpu.memory_space<semaphore_mem>> -> memref<!tpu.dma_semaphore, #tpu.memory_space<semaphore_mem>>
    tpu.enqueue_dma source(%162 : memref<1x128xf32, #tpu.memory_space<any>>) target(%163 : memref<1x128xf32, #tpu.memory_space<vmem>>) target_semaphore(%165 : memref<!tpu.dma_semaphore, #tpu.memory_space<semaphore_mem>>)
    %c15_i32 = arith.constant 15 : i32
    %c1_i32_89 = arith.constant 1 : i32
    %166 = arith.muli %c15_i32, %c1_i32_89 : i32
    %c0_i32_90 = arith.constant 0 : i32
    %167 = arith.addi %c0_i32_90, %166 : i32
    %168 = arith.addi %0, %167 : i32
    %169 = arith.index_cast %168 : i32 to index
    %170 = memref.load %arg1[%169] : memref<32xi32, #tpu.memory_space<smem>>
    %c0_i32_91 = arith.constant 0 : i32
    %c31_i32_92 = arith.constant 31 : i32
    %171 = arith.maxsi %c0_i32_91, %170 : i32
    %172 = arith.minsi %c31_i32_92, %171 : i32
    %c0_i32_93 = arith.constant 0 : i32
    %173 = tpu.memref_slice %arg2[%172, %c0_i32_93] : memref<32x128xf32, #tpu.memory_space<any>> -> memref<1x128xf32, #tpu.memory_space<any>>
    %c0_i32_94 = arith.constant 0 : i32
    %174 = tpu.memref_slice %arg5[%167, %c0_i32_94] : memref<16x128xf32, #tpu.memory_space<vmem>> -> memref<1x128xf32, #tpu.memory_space<vmem>>
    %175 = tpu.memref_slice %arg6[%167] : memref<16x!tpu.dma_semaphore, #tpu.memory_space<semaphore_mem>> -> memref<1x!tpu.dma_semaphore, #tpu.memory_space<semaphore_mem>>
    %176 = tpu.memref_squeeze %175 : memref<1x!tpu.dma_semaphore, #tpu.memory_space<semaphore_mem>> -> memref<!tpu.dma_semaphore, #tpu.memory_space<semaphore_mem>>
    tpu.enqueue_dma source(%173 : memref<1x128xf32, #tpu.memory_space<any>>) target(%174 : memref<1x128xf32, #tpu.memory_space<vmem>>) target_semaphore(%176 : memref<!tpu.dma_semaphore, #tpu.memory_space<semaphore_mem>>)
    %c16_i32_95 = arith.constant 16 : i32
    %c0_i32_96 = arith.constant 0 : i32
    %c1_i32_97 = arith.constant 1 : i32
    %177 = arith.muli %c0_i32_96, %c1_i32_97 : i32
    %c0_i32_98 = arith.constant 0 : i32
    %178 = arith.addi %c0_i32_98, %177 : i32
    %179 = arith.addi %0, %178 : i32
    %180 = arith.index_cast %179 : i32 to index
    %181 = memref.load %arg1[%180] : memref<32xi32, #tpu.memory_space<smem>>
    %c0_i32_99 = arith.constant 0 : i32
    %c31_i32_100 = arith.constant 31 : i32
    %182 = arith.maxsi %c0_i32_99, %181 : i32
    %183 = arith.minsi %c31_i32_100, %182 : i32
    %c0_i32_101 = arith.constant 0 : i32
    %184 = tpu.memref_slice %arg2[%183, %c0_i32_101] : memref<32x128xf32, #tpu.memory_space<any>> -> memref<1x128xf32, #tpu.memory_space<any>>
    %c0_i32_102 = arith.constant 0 : i32
    %185 = tpu.memref_slice %arg5[%178, %c0_i32_102] : memref<16x128xf32, #tpu.memory_space<vmem>> -> memref<1x128xf32, #tpu.memory_space<vmem>>
    %186 = tpu.memref_slice %arg6[%178] : memref<16x!tpu.dma_semaphore, #tpu.memory_space<semaphore_mem>> -> memref<1x!tpu.dma_semaphore, #tpu.memory_space<semaphore_mem>>
    %187 = tpu.memref_squeeze %186 : memref<1x!tpu.dma_semaphore, #tpu.memory_space<semaphore_mem>> -> memref<!tpu.dma_semaphore, #tpu.memory_space<semaphore_mem>>
    tpu.wait_dma2 semaphore(%187 : memref<!tpu.dma_semaphore, #tpu.memory_space<semaphore_mem>>) src(%184 : memref<1x128xf32, #tpu.memory_space<any>>) dst(%185 : memref<1x128xf32, #tpu.memory_space<vmem>>)
    %c1_i32_103 = arith.constant 1 : i32
    %c1_i32_104 = arith.constant 1 : i32
    %188 = arith.muli %c1_i32_103, %c1_i32_104 : i32
    %c0_i32_105 = arith.constant 0 : i32
    %189 = arith.addi %c0_i32_105, %188 : i32
    %190 = arith.addi %0, %189 : i32
    %191 = arith.index_cast %190 : i32 to index
    %192 = memref.load %arg1[%191] : memref<32xi32, #tpu.memory_space<smem>>
    %c0_i32_106 = arith.constant 0 : i32
    %c31_i32_107 = arith.constant 31 : i32
    %193 = arith.maxsi %c0_i32_106, %192 : i32
    %194 = arith.minsi %c31_i32_107, %193 : i32
    %c0_i32_108 = arith.constant 0 : i32
    %195 = tpu.memref_slice %arg2[%194, %c0_i32_108] : memref<32x128xf32, #tpu.memory_space<any>> -> memref<1x128xf32, #tpu.memory_space<any>>
    %c0_i32_109 = arith.constant 0 : i32
    %196 = tpu.memref_slice %arg5[%189, %c0_i32_109] : memref<16x128xf32, #tpu.memory_space<vmem>> -> memref<1x128xf32, #tpu.memory_space<vmem>>
    %197 = tpu.memref_slice %arg6[%189] : memref<16x!tpu.dma_semaphore, #tpu.memory_space<semaphore_mem>> -> memref<1x!tpu.dma_semaphore, #tpu.memory_space<semaphore_mem>>
    %198 = tpu.memref_squeeze %197 : memref<1x!tpu.dma_semaphore, #tpu.memory_space<semaphore_mem>> -> memref<!tpu.dma_semaphore, #tpu.memory_space<semaphore_mem>>
    tpu.wait_dma2 semaphore(%198 : memref<!tpu.dma_semaphore, #tpu.memory_space<semaphore_mem>>) src(%195 : memref<1x128xf32, #tpu.memory_space<any>>) dst(%196 : memref<1x128xf32, #tpu.memory_space<vmem>>)
    %c2_i32_110 = arith.constant 2 : i32
    %c1_i32_111 = arith.constant 1 : i32
    %199 = arith.muli %c2_i32_110, %c1_i32_111 : i32
    %c0_i32_112 = arith.constant 0 : i32
    %200 = arith.addi %c0_i32_112, %199 : i32
    %201 = arith.addi %0, %200 : i32
    %202 = arith.index_cast %201 : i32 to index
    %203 = memref.load %arg1[%202] : memref<32xi32, #tpu.memory_space<smem>>
    %c0_i32_113 = arith.constant 0 : i32
    %c31_i32_114 = arith.constant 31 : i32
    %204 = arith.maxsi %c0_i32_113, %203 : i32
    %205 = arith.minsi %c31_i32_114, %204 : i32
    %c0_i32_115 = arith.constant 0 : i32
    %206 = tpu.memref_slice %arg2[%205, %c0_i32_115] : memref<32x128xf32, #tpu.memory_space<any>> -> memref<1x128xf32, #tpu.memory_space<any>>
    %c0_i32_116 = arith.constant 0 : i32
    %207 = tpu.memref_slice %arg5[%200, %c0_i32_116] : memref<16x128xf32, #tpu.memory_space<vmem>> -> memref<1x128xf32, #tpu.memory_space<vmem>>
    %208 = tpu.memref_slice %arg6[%200] : memref<16x!tpu.dma_semaphore, #tpu.memory_space<semaphore_mem>> -> memref<1x!tpu.dma_semaphore, #tpu.memory_space<semaphore_mem>>
    %209 = tpu.memref_squeeze %208 : memref<1x!tpu.dma_semaphore, #tpu.memory_space<semaphore_mem>> -> memref<!tpu.dma_semaphore, #tpu.memory_space<semaphore_mem>>
    tpu.wait_dma2 semaphore(%209 : memref<!tpu.dma_semaphore, #tpu.memory_space<semaphore_mem>>) src(%206 : memref<1x128xf32, #tpu.memory_space<any>>) dst(%207 : memref<1x128xf32, #tpu.memory_space<vmem>>)
    %c3_i32_117 = arith.constant 3 : i32
    %c1_i32_118 = arith.constant 1 : i32
    %210 = arith.muli %c3_i32_117, %c1_i32_118 : i32
    %c0_i32_119 = arith.constant 0 : i32
    %211 = arith.addi %c0_i32_119, %210 : i32
    %212 = arith.addi %0, %211 : i32
    %213 = arith.index_cast %212 : i32 to index
    %214 = memref.load %arg1[%213] : memref<32xi32, #tpu.memory_space<smem>>
    %c0_i32_120 = arith.constant 0 : i32
    %c31_i32_121 = arith.constant 31 : i32
    %215 = arith.maxsi %c0_i32_120, %214 : i32
    %216 = arith.minsi %c31_i32_121, %215 : i32
    %c0_i32_122 = arith.constant 0 : i32
    %217 = tpu.memref_slice %arg2[%216, %c0_i32_122] : memref<32x128xf32, #tpu.memory_space<any>> -> memref<1x128xf32, #tpu.memory_space<any>>
    %c0_i32_123 = arith.constant 0 : i32
    %218 = tpu.memref_slice %arg5[%211, %c0_i32_123] : memref<16x128xf32, #tpu.memory_space<vmem>> -> memref<1x128xf32, #tpu.memory_space<vmem>>
    %219 = tpu.memref_slice %arg6[%211] : memref<16x!tpu.dma_semaphore, #tpu.memory_space<semaphore_mem>> -> memref<1x!tpu.dma_semaphore, #tpu.memory_space<semaphore_mem>>
    %220 = tpu.memref_squeeze %219 : memref<1x!tpu.dma_semaphore, #tpu.memory_space<semaphore_mem>> -> memref<!tpu.dma_semaphore, #tpu.memory_space<semaphore_mem>>
    tpu.wait_dma2 semaphore(%220 : memref<!tpu.dma_semaphore, #tpu.memory_space<semaphore_mem>>) src(%217 : memref<1x128xf32, #tpu.memory_space<any>>) dst(%218 : memref<1x128xf32, #tpu.memory_space<vmem>>)
    %c4_i32_124 = arith.constant 4 : i32
    %c1_i32_125 = arith.constant 1 : i32
    %221 = arith.muli %c4_i32_124, %c1_i32_125 : i32
    %c0_i32_126 = arith.constant 0 : i32
    %222 = arith.addi %c0_i32_126, %221 : i32
    %223 = arith.addi %0, %222 : i32
    %224 = arith.index_cast %223 : i32 to index
    %225 = memref.load %arg1[%224] : memref<32xi32, #tpu.memory_space<smem>>
    %c0_i32_127 = arith.constant 0 : i32
    %c31_i32_128 = arith.constant 31 : i32
    %226 = arith.maxsi %c0_i32_127, %225 : i32
    %227 = arith.minsi %c31_i32_128, %226 : i32
    %c0_i32_129 = arith.constant 0 : i32
    %228 = tpu.memref_slice %arg2[%227, %c0_i32_129] : memref<32x128xf32, #tpu.memory_space<any>> -> memref<1x128xf32, #tpu.memory_space<any>>
    %c0_i32_130 = arith.constant 0 : i32
    %229 = tpu.memref_slice %arg5[%222, %c0_i32_130] : memref<16x128xf32, #tpu.memory_space<vmem>> -> memref<1x128xf32, #tpu.memory_space<vmem>>
    %230 = tpu.memref_slice %arg6[%222] : memref<16x!tpu.dma_semaphore, #tpu.memory_space<semaphore_mem>> -> memref<1x!tpu.dma_semaphore, #tpu.memory_space<semaphore_mem>>
    %231 = tpu.memref_squeeze %230 : memref<1x!tpu.dma_semaphore, #tpu.memory_space<semaphore_mem>> -> memref<!tpu.dma_semaphore, #tpu.memory_space<semaphore_mem>>
    tpu.wait_dma2 semaphore(%231 : memref<!tpu.dma_semaphore, #tpu.memory_space<semaphore_mem>>) src(%228 : memref<1x128xf32, #tpu.memory_space<any>>) dst(%229 : memref<1x128xf32, #tpu.memory_space<vmem>>)
    %c5_i32_131 = arith.constant 5 : i32
    %c1_i32_132 = arith.constant 1 : i32
    %232 = arith.muli %c5_i32_131, %c1_i32_132 : i32
    %c0_i32_133 = arith.constant 0 : i32
    %233 = arith.addi %c0_i32_133, %232 : i32
    %234 = arith.addi %0, %233 : i32
    %235 = arith.index_cast %234 : i32 to index
    %236 = memref.load %arg1[%235] : memref<32xi32, #tpu.memory_space<smem>>
    %c0_i32_134 = arith.constant 0 : i32
    %c31_i32_135 = arith.constant 31 : i32
    %237 = arith.maxsi %c0_i32_134, %236 : i32
    %238 = arith.minsi %c31_i32_135, %237 : i32
    %c0_i32_136 = arith.constant 0 : i32
    %239 = tpu.memref_slice %arg2[%238, %c0_i32_136] : memref<32x128xf32, #tpu.memory_space<any>> -> memref<1x128xf32, #tpu.memory_space<any>>
    %c0_i32_137 = arith.constant 0 : i32
    %240 = tpu.memref_slice %arg5[%233, %c0_i32_137] : memref<16x128xf32, #tpu.memory_space<vmem>> -> memref<1x128xf32, #tpu.memory_space<vmem>>
    %241 = tpu.memref_slice %arg6[%233] : memref<16x!tpu.dma_semaphore, #tpu.memory_space<semaphore_mem>> -> memref<1x!tpu.dma_semaphore, #tpu.memory_space<semaphore_mem>>
    %242 = tpu.memref_squeeze %241 : memref<1x!tpu.dma_semaphore, #tpu.memory_space<semaphore_mem>> -> memref<!tpu.dma_semaphore, #tpu.memory_space<semaphore_mem>>
    tpu.wait_dma2 semaphore(%242 : memref<!tpu.dma_semaphore, #tpu.memory_space<semaphore_mem>>) src(%239 : memref<1x128xf32, #tpu.memory_space<any>>) dst(%240 : memref<1x128xf32, #tpu.memory_space<vmem>>)
    %c6_i32_138 = arith.constant 6 : i32
    %c1_i32_139 = arith.constant 1 : i32
    %243 = arith.muli %c6_i32_138, %c1_i32_139 : i32
    %c0_i32_140 = arith.constant 0 : i32
    %244 = arith.addi %c0_i32_140, %243 : i32
    %245 = arith.addi %0, %244 : i32
    %246 = arith.index_cast %245 : i32 to index
    %247 = memref.load %arg1[%246] : memref<32xi32, #tpu.memory_space<smem>>
    %c0_i32_141 = arith.constant 0 : i32
    %c31_i32_142 = arith.constant 31 : i32
    %248 = arith.maxsi %c0_i32_141, %247 : i32
    %249 = arith.minsi %c31_i32_142, %248 : i32
    %c0_i32_143 = arith.constant 0 : i32
    %250 = tpu.memref_slice %arg2[%249, %c0_i32_143] : memref<32x128xf32, #tpu.memory_space<any>> -> memref<1x128xf32, #tpu.memory_space<any>>
    %c0_i32_144 = arith.constant 0 : i32
    %251 = tpu.memref_slice %arg5[%244, %c0_i32_144] : memref<16x128xf32, #tpu.memory_space<vmem>> -> memref<1x128xf32, #tpu.memory_space<vmem>>
    %252 = tpu.memref_slice %arg6[%244] : memref<16x!tpu.dma_semaphore, #tpu.memory_space<semaphore_mem>> -> memref<1x!tpu.dma_semaphore, #tpu.memory_space<semaphore_mem>>
    %253 = tpu.memref_squeeze %252 : memref<1x!tpu.dma_semaphore, #tpu.memory_space<semaphore_mem>> -> memref<!tpu.dma_semaphore, #tpu.memory_space<semaphore_mem>>
    tpu.wait_dma2 semaphore(%253 : memref<!tpu.dma_semaphore, #tpu.memory_space<semaphore_mem>>) src(%250 : memref<1x128xf32, #tpu.memory_space<any>>) dst(%251 : memref<1x128xf32, #tpu.memory_space<vmem>>)
    %c7_i32_145 = arith.constant 7 : i32
    %c1_i32_146 = arith.constant 1 : i32
    %254 = arith.muli %c7_i32_145, %c1_i32_146 : i32
    %c0_i32_147 = arith.constant 0 : i32
    %255 = arith.addi %c0_i32_147, %254 : i32
    %256 = arith.addi %0, %255 : i32
    %257 = arith.index_cast %256 : i32 to index
    %258 = memref.load %arg1[%257] : memref<32xi32, #tpu.memory_space<smem>>
    %c0_i32_148 = arith.constant 0 : i32
    %c31_i32_149 = arith.constant 31 : i32
    %259 = arith.maxsi %c0_i32_148, %258 : i32
    %260 = arith.minsi %c31_i32_149, %259 : i32
    %c0_i32_150 = arith.constant 0 : i32
    %261 = tpu.memref_slice %arg2[%260, %c0_i32_150] : memref<32x128xf32, #tpu.memory_space<any>> -> memref<1x128xf32, #tpu.memory_space<any>>
    %c0_i32_151 = arith.constant 0 : i32
    %262 = tpu.memref_slice %arg5[%255, %c0_i32_151] : memref<16x128xf32, #tpu.memory_space<vmem>> -> memref<1x128xf32, #tpu.memory_space<vmem>>
    %263 = tpu.memref_slice %arg6[%255] : memref<16x!tpu.dma_semaphore, #tpu.memory_space<semaphore_mem>> -> memref<1x!tpu.dma_semaphore, #tpu.memory_space<semaphore_mem>>
    %264 = tpu.memref_squeeze %263 : memref<1x!tpu.dma_semaphore, #tpu.memory_space<semaphore_mem>> -> memref<!tpu.dma_semaphore, #tpu.memory_space<semaphore_mem>>
    tpu.wait_dma2 semaphore(%264 : memref<!tpu.dma_semaphore, #tpu.memory_space<semaphore_mem>>) src(%261 : memref<1x128xf32, #tpu.memory_space<any>>) dst(%262 : memref<1x128xf32, #tpu.memory_space<vmem>>)
    %c8_i32_152 = arith.constant 8 : i32
    %c1_i32_153 = arith.constant 1 : i32
    %265 = arith.muli %c8_i32_152, %c1_i32_153 : i32
    %c0_i32_154 = arith.constant 0 : i32
    %266 = arith.addi %c0_i32_154, %265 : i32
    %267 = arith.addi %0, %266 : i32
    %268 = arith.index_cast %267 : i32 to index
    %269 = memref.load %arg1[%268] : memref<32xi32, #tpu.memory_space<smem>>
    %c0_i32_155 = arith.constant 0 : i32
    %c31_i32_156 = arith.constant 31 : i32
    %270 = arith.maxsi %c0_i32_155, %269 : i32
    %271 = arith.minsi %c31_i32_156, %270 : i32
    %c0_i32_157 = arith.constant 0 : i32
    %272 = tpu.memref_slice %arg2[%271, %c0_i32_157] : memref<32x128xf32, #tpu.memory_space<any>> -> memref<1x128xf32, #tpu.memory_space<any>>
    %c0_i32_158 = arith.constant 0 : i32
    %273 = tpu.memref_slice %arg5[%266, %c0_i32_158] : memref<16x128xf32, #tpu.memory_space<vmem>> -> memref<1x128xf32, #tpu.memory_space<vmem>>
    %274 = tpu.memref_slice %arg6[%266] : memref<16x!tpu.dma_semaphore, #tpu.memory_space<semaphore_mem>> -> memref<1x!tpu.dma_semaphore, #tpu.memory_space<semaphore_mem>>
    %275 = tpu.memref_squeeze %274 : memref<1x!tpu.dma_semaphore, #tpu.memory_space<semaphore_mem>> -> memref<!tpu.dma_semaphore, #tpu.memory_space<semaphore_mem>>
    tpu.wait_dma2 semaphore(%275 : memref<!tpu.dma_semaphore, #tpu.memory_space<semaphore_mem>>) src(%272 : memref<1x128xf32, #tpu.memory_space<any>>) dst(%273 : memref<1x128xf32, #tpu.memory_space<vmem>>)
    %c9_i32_159 = arith.constant 9 : i32
    %c1_i32_160 = arith.constant 1 : i32
    %276 = arith.muli %c9_i32_159, %c1_i32_160 : i32
    %c0_i32_161 = arith.constant 0 : i32
    %277 = arith.addi %c0_i32_161, %276 : i32
    %278 = arith.addi %0, %277 : i32
    %279 = arith.index_cast %278 : i32 to index
    %280 = memref.load %arg1[%279] : memref<32xi32, #tpu.memory_space<smem>>
    %c0_i32_162 = arith.constant 0 : i32
    %c31_i32_163 = arith.constant 31 : i32
    %281 = arith.maxsi %c0_i32_162, %280 : i32
    %282 = arith.minsi %c31_i32_163, %281 : i32
    %c0_i32_164 = arith.constant 0 : i32
    %283 = tpu.memref_slice %arg2[%282, %c0_i32_164] : memref<32x128xf32, #tpu.memory_space<any>> -> memref<1x128xf32, #tpu.memory_space<any>>
    %c0_i32_165 = arith.constant 0 : i32
    %284 = tpu.memref_slice %arg5[%277, %c0_i32_165] : memref<16x128xf32, #tpu.memory_space<vmem>> -> memref<1x128xf32, #tpu.memory_space<vmem>>
    %285 = tpu.memref_slice %arg6[%277] : memref<16x!tpu.dma_semaphore, #tpu.memory_space<semaphore_mem>> -> memref<1x!tpu.dma_semaphore, #tpu.memory_space<semaphore_mem>>
    %286 = tpu.memref_squeeze %285 : memref<1x!tpu.dma_semaphore, #tpu.memory_space<semaphore_mem>> -> memref<!tpu.dma_semaphore, #tpu.memory_space<semaphore_mem>>
    tpu.wait_dma2 semaphore(%286 : memref<!tpu.dma_semaphore, #tpu.memory_space<semaphore_mem>>) src(%283 : memref<1x128xf32, #tpu.memory_space<any>>) dst(%284 : memref<1x128xf32, #tpu.memory_space<vmem>>)
    %c10_i32_166 = arith.constant 10 : i32
    %c1_i32_167 = arith.constant 1 : i32
    %287 = arith.muli %c10_i32_166, %c1_i32_167 : i32
    %c0_i32_168 = arith.constant 0 : i32
    %288 = arith.addi %c0_i32_168, %287 : i32
    %289 = arith.addi %0, %288 : i32
    %290 = arith.index_cast %289 : i32 to index
    %291 = memref.load %arg1[%290] : memref<32xi32, #tpu.memory_space<smem>>
    %c0_i32_169 = arith.constant 0 : i32
    %c31_i32_170 = arith.constant 31 : i32
    %292 = arith.maxsi %c0_i32_169, %291 : i32
    %293 = arith.minsi %c31_i32_170, %292 : i32
    %c0_i32_171 = arith.constant 0 : i32
    %294 = tpu.memref_slice %arg2[%293, %c0_i32_171] : memref<32x128xf32, #tpu.memory_space<any>> -> memref<1x128xf32, #tpu.memory_space<any>>
    %c0_i32_172 = arith.constant 0 : i32
    %295 = tpu.memref_slice %arg5[%288, %c0_i32_172] : memref<16x128xf32, #tpu.memory_space<vmem>> -> memref<1x128xf32, #tpu.memory_space<vmem>>
    %296 = tpu.memref_slice %arg6[%288] : memref<16x!tpu.dma_semaphore, #tpu.memory_space<semaphore_mem>> -> memref<1x!tpu.dma_semaphore, #tpu.memory_space<semaphore_mem>>
    %297 = tpu.memref_squeeze %296 : memref<1x!tpu.dma_semaphore, #tpu.memory_space<semaphore_mem>> -> memref<!tpu.dma_semaphore, #tpu.memory_space<semaphore_mem>>
    tpu.wait_dma2 semaphore(%297 : memref<!tpu.dma_semaphore, #tpu.memory_space<semaphore_mem>>) src(%294 : memref<1x128xf32, #tpu.memory_space<any>>) dst(%295 : memref<1x128xf32, #tpu.memory_space<vmem>>)
    %c11_i32_173 = arith.constant 11 : i32
    %c1_i32_174 = arith.constant 1 : i32
    %298 = arith.muli %c11_i32_173, %c1_i32_174 : i32
    %c0_i32_175 = arith.constant 0 : i32
    %299 = arith.addi %c0_i32_175, %298 : i32
    %300 = arith.addi %0, %299 : i32
    %301 = arith.index_cast %300 : i32 to index
    %302 = memref.load %arg1[%301] : memref<32xi32, #tpu.memory_space<smem>>
    %c0_i32_176 = arith.constant 0 : i32
    %c31_i32_177 = arith.constant 31 : i32
    %303 = arith.maxsi %c0_i32_176, %302 : i32
    %304 = arith.minsi %c31_i32_177, %303 : i32
    %c0_i32_178 = arith.constant 0 : i32
    %305 = tpu.memref_slice %arg2[%304, %c0_i32_178] : memref<32x128xf32, #tpu.memory_space<any>> -> memref<1x128xf32, #tpu.memory_space<any>>
    %c0_i32_179 = arith.constant 0 : i32
    %306 = tpu.memref_slice %arg5[%299, %c0_i32_179] : memref<16x128xf32, #tpu.memory_space<vmem>> -> memref<1x128xf32, #tpu.memory_space<vmem>>
    %307 = tpu.memref_slice %arg6[%299] : memref<16x!tpu.dma_semaphore, #tpu.memory_space<semaphore_mem>> -> memref<1x!tpu.dma_semaphore, #tpu.memory_space<semaphore_mem>>
    %308 = tpu.memref_squeeze %307 : memref<1x!tpu.dma_semaphore, #tpu.memory_space<semaphore_mem>> -> memref<!tpu.dma_semaphore, #tpu.memory_space<semaphore_mem>>
    tpu.wait_dma2 semaphore(%308 : memref<!tpu.dma_semaphore, #tpu.memory_space<semaphore_mem>>) src(%305 : memref<1x128xf32, #tpu.memory_space<any>>) dst(%306 : memref<1x128xf32, #tpu.memory_space<vmem>>)
    %c12_i32_180 = arith.constant 12 : i32
    %c1_i32_181 = arith.constant 1 : i32
    %309 = arith.muli %c12_i32_180, %c1_i32_181 : i32
    %c0_i32_182 = arith.constant 0 : i32
    %310 = arith.addi %c0_i32_182, %309 : i32
    %311 = arith.addi %0, %310 : i32
    %312 = arith.index_cast %311 : i32 to index
    %313 = memref.load %arg1[%312] : memref<32xi32, #tpu.memory_space<smem>>
    %c0_i32_183 = arith.constant 0 : i32
    %c31_i32_184 = arith.constant 31 : i32
    %314 = arith.maxsi %c0_i32_183, %313 : i32
    %315 = arith.minsi %c31_i32_184, %314 : i32
    %c0_i32_185 = arith.constant 0 : i32
    %316 = tpu.memref_slice %arg2[%315, %c0_i32_185] : memref<32x128xf32, #tpu.memory_space<any>> -> memref<1x128xf32, #tpu.memory_space<any>>
    %c0_i32_186 = arith.constant 0 : i32
    %317 = tpu.memref_slice %arg5[%310, %c0_i32_186] : memref<16x128xf32, #tpu.memory_space<vmem>> -> memref<1x128xf32, #tpu.memory_space<vmem>>
    %318 = tpu.memref_slice %arg6[%310] : memref<16x!tpu.dma_semaphore, #tpu.memory_space<semaphore_mem>> -> memref<1x!tpu.dma_semaphore, #tpu.memory_space<semaphore_mem>>
    %319 = tpu.memref_squeeze %318 : memref<1x!tpu.dma_semaphore, #tpu.memory_space<semaphore_mem>> -> memref<!tpu.dma_semaphore, #tpu.memory_space<semaphore_mem>>
    tpu.wait_dma2 semaphore(%319 : memref<!tpu.dma_semaphore, #tpu.memory_space<semaphore_mem>>) src(%316 : memref<1x128xf32, #tpu.memory_space<any>>) dst(%317 : memref<1x128xf32, #tpu.memory_space<vmem>>)
    %c13_i32_187 = arith.constant 13 : i32
    %c1_i32_188 = arith.constant 1 : i32
    %320 = arith.muli %c13_i32_187, %c1_i32_188 : i32
    %c0_i32_189 = arith.constant 0 : i32
    %321 = arith.addi %c0_i32_189, %320 : i32
    %322 = arith.addi %0, %321 : i32
    %323 = arith.index_cast %322 : i32 to index
    %324 = memref.load %arg1[%323] : memref<32xi32, #tpu.memory_space<smem>>
    %c0_i32_190 = arith.constant 0 : i32
    %c31_i32_191 = arith.constant 31 : i32
    %325 = arith.maxsi %c0_i32_190, %324 : i32
    %326 = arith.minsi %c31_i32_191, %325 : i32
    %c0_i32_192 = arith.constant 0 : i32
    %327 = tpu.memref_slice %arg2[%326, %c0_i32_192] : memref<32x128xf32, #tpu.memory_space<any>> -> memref<1x128xf32, #tpu.memory_space<any>>
    %c0_i32_193 = arith.constant 0 : i32
    %328 = tpu.memref_slice %arg5[%321, %c0_i32_193] : memref<16x128xf32, #tpu.memory_space<vmem>> -> memref<1x128xf32, #tpu.memory_space<vmem>>
    %329 = tpu.memref_slice %arg6[%321] : memref<16x!tpu.dma_semaphore, #tpu.memory_space<semaphore_mem>> -> memref<1x!tpu.dma_semaphore, #tpu.memory_space<semaphore_mem>>
    %330 = tpu.memref_squeeze %329 : memref<1x!tpu.dma_semaphore, #tpu.memory_space<semaphore_mem>> -> memref<!tpu.dma_semaphore, #tpu.memory_space<semaphore_mem>>
    tpu.wait_dma2 semaphore(%330 : memref<!tpu.dma_semaphore, #tpu.memory_space<semaphore_mem>>) src(%327 : memref<1x128xf32, #tpu.memory_space<any>>) dst(%328 : memref<1x128xf32, #tpu.memory_space<vmem>>)
    %c14_i32_194 = arith.constant 14 : i32
    %c1_i32_195 = arith.constant 1 : i32
    %331 = arith.muli %c14_i32_194, %c1_i32_195 : i32
    %c0_i32_196 = arith.constant 0 : i32
    %332 = arith.addi %c0_i32_196, %331 : i32
    %333 = arith.addi %0, %332 : i32
    %334 = arith.index_cast %333 : i32 to index
    %335 = memref.load %arg1[%334] : memref<32xi32, #tpu.memory_space<smem>>
    %c0_i32_197 = arith.constant 0 : i32
    %c31_i32_198 = arith.constant 31 : i32
    %336 = arith.maxsi %c0_i32_197, %335 : i32
    %337 = arith.minsi %c31_i32_198, %336 : i32
    %c0_i32_199 = arith.constant 0 : i32
    %338 = tpu.memref_slice %arg2[%337, %c0_i32_199] : memref<32x128xf32, #tpu.memory_space<any>> -> memref<1x128xf32, #tpu.memory_space<any>>
    %c0_i32_200 = arith.constant 0 : i32
    %339 = tpu.memref_slice %arg5[%332, %c0_i32_200] : memref<16x128xf32, #tpu.memory_space<vmem>> -> memref<1x128xf32, #tpu.memory_space<vmem>>
    %340 = tpu.memref_slice %arg6[%332] : memref<16x!tpu.dma_semaphore, #tpu.memory_space<semaphore_mem>> -> memref<1x!tpu.dma_semaphore, #tpu.memory_space<semaphore_mem>>
    %341 = tpu.memref_squeeze %340 : memref<1x!tpu.dma_semaphore, #tpu.memory_space<semaphore_mem>> -> memref<!tpu.dma_semaphore, #tpu.memory_space<semaphore_mem>>
    tpu.wait_dma2 semaphore(%341 : memref<!tpu.dma_semaphore, #tpu.memory_space<semaphore_mem>>) src(%338 : memref<1x128xf32, #tpu.memory_space<any>>) dst(%339 : memref<1x128xf32, #tpu.memory_space<vmem>>)
    %c15_i32_201 = arith.constant 15 : i32
    %c1_i32_202 = arith.constant 1 : i32
    %342 = arith.muli %c15_i32_201, %c1_i32_202 : i32
    %c0_i32_203 = arith.constant 0 : i32
    %343 = arith.addi %c0_i32_203, %342 : i32
    %344 = arith.addi %0, %343 : i32
    %345 = arith.index_cast %344 : i32 to index
    %346 = memref.load %arg1[%345] : memref<32xi32, #tpu.memory_space<smem>>
    %c0_i32_204 = arith.constant 0 : i32
    %c31_i32_205 = arith.constant 31 : i32
    %347 = arith.maxsi %c0_i32_204, %346 : i32
    %348 = arith.minsi %c31_i32_205, %347 : i32
    %c0_i32_206 = arith.constant 0 : i32
    %349 = tpu.memref_slice %arg2[%348, %c0_i32_206] : memref<32x128xf32, #tpu.memory_space<any>> -> memref<1x128xf32, #tpu.memory_space<any>>
    %c0_i32_207 = arith.constant 0 : i32
    %350 = tpu.memref_slice %arg5[%343, %c0_i32_207] : memref<16x128xf32, #tpu.memory_space<vmem>> -> memref<1x128xf32, #tpu.memory_space<vmem>>
    %351 = tpu.memref_slice %arg6[%343] : memref<16x!tpu.dma_semaphore, #tpu.memory_space<semaphore_mem>> -> memref<1x!tpu.dma_semaphore, #tpu.memory_space<semaphore_mem>>
    %352 = tpu.memref_squeeze %351 : memref<1x!tpu.dma_semaphore, #tpu.memory_space<semaphore_mem>> -> memref<!tpu.dma_semaphore, #tpu.memory_space<semaphore_mem>>
    tpu.wait_dma2 semaphore(%352 : memref<!tpu.dma_semaphore, #tpu.memory_space<semaphore_mem>>) src(%349 : memref<1x128xf32, #tpu.memory_space<any>>) dst(%350 : memref<1x128xf32, #tpu.memory_space<vmem>>)
    %c16_i32_208 = arith.constant 16 : i32
    %c0 = arith.constant 0 : index
    %c0_209 = arith.constant 0 : index
    %353 = vector.load %arg5[%c0, %c0_209] : memref<16x128xf32, #tpu.memory_space<vmem>>, vector<16x128xf32>
    %c0_210 = arith.constant 0 : index
    %c0_211 = arith.constant 0 : index
    %354 = vector.load %arg3[%c0_210, %c0_211] : memref<16x128xf32, #tpu.memory_space<vmem>>, vector<16x128xf32>
    %355 = arith.addf %353, %354 : vector<16x128xf32>
    %c0_212 = arith.constant 0 : index
    %c0_213 = arith.constant 0 : index
    %356 = vector.load %arg4[%c0_212, %c0_213] : memref<16x128xf32, #tpu.memory_space<vmem>>, vector<16x128xf32>
    tpu.vector_store %arg4[%c0_212, %c0_213], %355 {strides = array<i32>} : memref<16x128xf32, #tpu.memory_space<vmem>>, vector<16x128xf32>,
    return
  }
  func.func @transform_1(%arg0: i32, %arg1: memref<32xi32, #tpu.memory_space<smem>>) -> (i32, i32) {
    %c0_i32 = arith.constant 0 : i32
    %c0_i32_0 = arith.constant 0 : i32
    %c0_i32_1 = arith.constant 0 : i32
    return %c0_i32, %c0_i32_0 : i32, i32
  }
  func.func @transform_2(%arg0: i32, %arg1: memref<32xi32, #tpu.memory_space<smem>>) -> (i32, i32) {
    %c0_i32 = arith.constant 0 : i32
    %c0_i32_0 = arith.constant 0 : i32
    return %arg0, %c0_i32 : i32, i32
  }
}

</mosaic_0001>

<llo_original>
// kernel: tpu_custom_call.1
$region0: #{tpu_custom_call.1}
  #allocation0 [shape = 'u32[]', space=smem, size = 0x4, offset = 0x4, fixed_abs, tag = 'smem constant byte address 0x4 - core index']
  #allocation1 [shape = 'u32[144,128]{1,0:T(1,128)}', space=vmem, size = 0x12000, scoped, tag = 'internal scratch']
  #allocation2 [shape = 'f32[16,128]{1,0:T(8,128)}', space=vmem, size = 0x2000, scoped, tag = 'scratch operand']
  #allocation3 [shape = 's32[16]{0}', space=sflag, size = 0x40, scoped, tag = 'scratch operand']
  #allocation4 [shape = 's32[1]{0}', space=sflag, size = 0x4, scoped, tag = 'scoped memory for tpu_custom_call.1']
  #allocation5 [shape = 'u8[512]{0}', space=smem, size = 0x200, scoped, tag = 'prefetched SMEM operand 0']
  #allocation10 [shape = 's32[]', space=sflag, size = 0x4, offset = 0, fixed_abs, tag = 'sflag constant byte address 0x0 - dummy sync flag']
  #allocation11 [shape = 's32[]', space=sflag, size = 0x4, offset = 0, fixed_abs, tag = 'sflag constant byte address 0x0 - dummy sync flag']
  #allocation12 [shape = 'u32[]', space=smem, size = 0x4, offset = 0x44, fixed_abs, tag = 'smem constant byte address 0x44 - assertion arg 0']
  #allocation13 [shape = 'u32[]', space=smem, size = 0x4, offset = 0x48, fixed_abs, tag = 'smem constant byte address 0x48 - assertion arg 1']
  #allocation14 [shape = 's32[]', space=sflag, size = 0x4, offset = 0, fixed_abs, tag = 'sflag constant byte address 0x0 - dummy sync flag']
  #allocation15 [shape = 's32[]', space=sflag, size = 0x4, offset = 0, fixed_abs, tag = 'sflag constant byte address 0x0 - dummy sync flag']
  #allocation16 [shape = 's32[]', space=sflag, size = 0x4, offset = 0, fixed_abs, tag = 'sflag constant byte address 0x0 - dummy sync flag']
  #allocation17 [shape = 's32[]', space=sflag, size = 0x4, offset = 0, fixed_abs, tag = 'sflag constant byte address 0x0 - dummy sync flag']
  #allocation18 [shape = 's32[]', space=sflag, size = 0x4, offset = 0, fixed_abs, tag = 'sflag constant byte address 0x0 - dummy sync flag']
  #allocation19 [shape = 's32[]', space=sflag, size = 0x4, offset = 0, fixed_abs, tag = 'sflag constant byte address 0x0 - dummy sync flag']
  #allocation20 [shape = 's32[]', space=sflag, size = 0x4, offset = 0, fixed_abs, tag = 'sflag constant byte address 0x0 - dummy sync flag']
  #allocation21 [shape = 's32[]', space=sflag, size = 0x4, offset = 0, fixed_abs, tag = 'sflag constant byte address 0x0 - dummy sync flag']
  #allocation22 [shape = 's32[]', space=sflag, size = 0x4, offset = 0, fixed_abs, tag = 'sflag constant byte address 0x0 - dummy sync flag']
  #allocation23 [shape = 's32[]', space=sflag, size = 0x4, offset = 0, fixed_abs, tag = 'sflag constant byte address 0x0 - dummy sync flag']
  #allocation24 [shape = 's32[]', space=sflag, size = 0x4, offset = 0, fixed_abs, tag = 'sflag constant byte address 0x0 - dummy sync flag']
  #allocation25 [shape = 's32[]', space=sflag, size = 0x4, offset = 0, fixed_abs, tag = 'sflag constant byte address 0x0 - dummy sync flag']
  #allocation26 [shape = 's32[]', space=sflag, size = 0x4, offset = 0, fixed_abs, tag = 'sflag constant byte address 0x0 - dummy sync flag']
  #allocation27 [shape = 's32[]', space=sflag, size = 0x4, offset = 0, fixed_abs, tag = 'sflag constant byte address 0x0 - dummy sync flag']
  #allocation28 [shape = 's32[]', space=sflag, size = 0x4, offset = 0, fixed_abs, tag = 'sflag constant byte address 0x0 - dummy sync flag']
  #allocation29 [shape = 's32[]', space=sflag, size = 0x4, offset = 0, fixed_abs, tag = 'sflag constant byte address 0x0 - dummy sync flag']
  #allocation30 [shape = 's32[]', space=sflag, size = 0x4, offset = 0, fixed_abs, tag = 'sflag constant byte address 0x0 - dummy sync flag']
  #allocation31 [shape = 's32[]', space=sflag, size = 0x4, offset = 0, fixed_abs, tag = 'sflag constant byte address 0x0 - dummy sync flag']
  #allocation32 [shape = 's32[]', space=sflag, size = 0x4, offset = 0, fixed_abs, tag = 'sflag constant byte address 0x0 - dummy sync flag']
  #allocation33 [shape = 's32[]', space=sflag, size = 0x4, offset = 0, fixed_abs, tag = 'sflag constant byte address 0x0 - dummy sync flag']
  #allocation34 [shape = 's32[]', space=sflag, size = 0x4, offset = 0, fixed_abs, tag = 'sflag constant byte address 0x0 - dummy sync flag']
  #allocation35 [shape = 's32[]', space=sflag, size = 0x4, offset = 0, fixed_abs, tag = 'sflag constant byte address 0x0 - dummy sync flag']
  #allocation36 [shape = 's32[]', space=sflag, size = 0x4, offset = 0, fixed_abs, tag = 'sflag constant byte address 0x0 - dummy sync flag']
  #allocation37 [shape = 's32[]', space=sflag, size = 0x4, offset = 0, fixed_abs, tag = 'sflag constant byte address 0x0 - dummy sync flag']
  #allocation38 [shape = 's32[]', space=sflag, size = 0x4, offset = 0, fixed_abs, tag = 'sflag constant byte address 0x0 - dummy sync flag']
  #allocation39 [shape = 's32[]', space=sflag, size = 0x4, offset = 0, fixed_abs, tag = 'sflag constant byte address 0x0 - dummy sync flag']
  #allocation40 [shape = 's32[]', space=sflag, size = 0x4, offset = 0, fixed_abs, tag = 'sflag constant byte address 0x0 - dummy sync flag']
  #allocation41 [shape = 's32[]', space=sflag, size = 0x4, offset = 0, fixed_abs, tag = 'sflag constant byte address 0x0 - dummy sync flag']
  #allocation42 [shape = 's32[]', space=sflag, size = 0x4, offset = 0, fixed_abs, tag = 'sflag constant byte address 0x0 - dummy sync flag']
  #allocation43 [shape = 's32[]', space=sflag, size = 0x4, offset = 0, fixed_abs, tag = 'sflag constant byte address 0x0 - dummy sync flag']
  %s0 = inlined_call_operand.hbm [shape: s32[32], index: 0, kind: input, shape index: {}]
  %s1 = inlined_call_operand.hbm [shape: f32[32,128], index: 1, kind: input, shape index: {}]
  %s2 = inlined_call_operand.hbm [shape: f32[16,128], index: 2, kind: input, shape index: {}]
  %s3 = inlined_call_operand.hbm [shape: f32[32,128], index: 3, kind: output, shape index: {}]
  %s4 = sld [smem:[#allocation0]]
  $region105: #{tpu_custom_call.1} parent=0
    _
  %s6 = ssub.s32 1, %s4
  %s7 = scalar_select 0, %s6, %s4
  %9 = dma.hbm_to_smem %s0, 16, [#allocation5], [#allocation4]
  %10 = dma.done [#allocation4], 16
  %11 = sfence
  $region1: #{tpu_custom_call.1} parent=0
    #allocation6 [shape = 'u8[8192]{0}', space=vmem, size = 0x2000, scoped, tag = 'input window, operand 2, single buffered']
    #allocation7 [shape = 's32[2]{0}', space=sflag, size = 0x8, scoped, tag = 'scoped memory for tpu_custom_call.1']
    #allocation8 [shape = 's32[2]{0}', space=sflag, size = 0x8, scoped, tag = 'scoped memory for tpu_custom_call.1']
    #allocation9 [shape = 'u8[16384]{0}', space=vmem, size = 0x4000, scoped, tag = 'output window, operand 0']
    %12 = vsyncpa [#allocation7], 0
    %13 = vsyncpa [#allocation8], 0
    %s14 = scalar_lea.sflag [#allocation8], 1
    %15 = vsyncpa %s14, 0
    loop: start=0, step=1, limit=4
    $region2: #{tpu_custom_call.1} parent=1 // loop_pre_header
      _
    $region3: #{tpu_custom_call.1} parent=1 // loop_header
      %s17 = sphi 0, %s21
      %p18 = scmp.ge.s32.totalorder %s17, 4
      %s25 = sphi 0, %s25
      %s27 = sphi 0, %s25
      %s28 = sphi 0, %s27
      %s42 = sphi 0, %s28
      %s48 = sphi 0, %s50
      %s51 = sphi 0, %s48
      %s52 = sphi 0, %s51
      %s68 = sphi 0, %s52
    $region4: #{tpu_custom_call.1} parent=1 // loop_header_branch
      %20 = sbr.rel (%p18) target = $region8
    $region5: #{tpu_custom_call.1} parent=1 // loop_body
      %s22 = ssub.s32 %s17, 1
      %s23 = ssub.s32 %s17, 2
      %s24 = sadd.s32 %s17, 1
      %s26 = sadd.s32 %s25, 1
      %p29 = scmp.eq.s32.totalorder %s17, 1
      %p30 = scmp.ne.s32.totalorder %s25, %s27
      %p31 = scmp.eq.s32.totalorder %s17, 0
      %p32 = por %p30, %p31
      %p33 = scmp.ne.s32.totalorder %s25, %s27
      %p34 = scmp.eq.s32.totalorder %s22, 1
      %p35 = por %p33, %p34
      %p36 = scmp.ne.s32.totalorder %s27, %s28
      %p37 = scmp.eq.s32.totalorder %s22, 0
      %p38 = por %p36, %p37
      %p39 = scmp.ne.s32.totalorder %s27, %s28
      %p40 = scmp.eq.s32.totalorder %s23, 1
      %p41 = por %p39, %p40
      %p43 = scmp.ne.s32.totalorder %s28, %s42
      %p44 = scmp.eq.s32.totalorder %s23, 0
      %p45 = por %p43, %p44
      %s46 = ssub.s32 %s17, %s24
      %p47 = scmp.eq.s32.totalorder %s46, 0
      %s49 = sadd.s32 %s48, 1
      %s50 = scalar_select %p47, %s48, %s49
      %p53 = pneg %p47
      %p54 = scmp.eq.s32.totalorder %s17, 1
      %p55 = por %p53, %p54
      %p56 = scmp.ne.s32.totalorder %s48, %s51
      %p57 = scmp.eq.s32.totalorder %s17, 0
      %p58 = por %p56, %p57
      %p59 = scmp.ne.s32.totalorder %s48, %s51
      %p60 = scmp.eq.s32.totalorder %s22, 1
      %p61 = por %p59, %p60
      %p62 = scmp.ne.s32.totalorder %s51, %s52
      %p63 = scmp.eq.s32.totalorder %s22, 0
      %p64 = por %p62, %p63
      %p65 = scmp.ne.s32.totalorder %s51, %s52
      %p66 = scmp.eq.s32.totalorder %s23, 1
      %p67 = por %p65, %p66
      %p69 = scmp.ne.s32.totalorder %s52, %s68
      %p70 = scmp.eq.s32.totalorder %s23, 0
      %p71 = por %p69, %p70
      %p72 = scmp.le.s32.totalorder 1, %s17
      %p73 = scmp.lt.s32.totalorder %s17, 3
      %p74 = pnand %p72, %p73
      %p75 = pneg %p74
      // Predicated region
      $region9: #{tpu_custom_call.1} parent=5 // pred_check
        _
      $region10: #{tpu_custom_call.1} parent=5 // pred_check_branch
        %77 = sbr.rel (%p74) target = $region12
      $region11: #{tpu_custom_call.1} parent=5 // pred_region
        %s78 = ssub.s32 %s17, 1
        // Predicated region
        $region13: #{tpu_custom_call.1} parent=11 // pred_check
          %p79 = pneg %p38
        $region14: #{tpu_custom_call.1} parent=11 // pred_check_branch
          %81 = sbr.rel (%p79) target = $region16
        $region15: #{tpu_custom_call.1} parent=11 // pred_region
          %s83 = ssub.s32 256, 256
          %84 = vsyncadd [#allocation7], %s83
          %s85 = sshll.u32 [#allocation6], 4
          %s86 = int_to_ptr.vmem [resolvable:$true] %s85
          %91 = dma.hbm_to_vmem [thread:$0]  %s2, 256, %s86, [#allocation7], 128, 128, 8
        $region16: #{tpu_custom_call.1} parent=11 // pred_fallthru
          _
      $region12: #{tpu_custom_call.1} parent=5 // pred_fallthru
        _
      %p92 = scmp.lt.s32.totalorder %s17, 2
      // Predicated region
      $region17: #{tpu_custom_call.1} parent=5 // pred_check
        %p93 = pneg %p92
      $region18: #{tpu_custom_call.1} parent=5 // pred_check_branch
        %95 = sbr.rel (%p93) target = $region20
      $region19: #{tpu_custom_call.1} parent=5 // pred_region
        _
      $region20: #{tpu_custom_call.1} parent=5 // pred_fallthru
        _
      %p96 = scmp.le.s32.totalorder 1, %s17
      %p97 = scmp.lt.s32.totalorder %s17, 3
      %p98 = pnand %p96, %p97
      %p99 = pneg %p98
      // Predicated region
      $region21: #{tpu_custom_call.1} parent=5 // pred_check
        _
      $region22: #{tpu_custom_call.1} parent=5 // pred_check_branch
        %101 = sbr.rel (%p98) target = $region24
      $region23: #{tpu_custom_call.1} parent=5 // pred_region
        %s102 = ssub.s32 %s17, 1
        // Predicated region
        $region25: #{tpu_custom_call.1} parent=23 // pred_check
          %p103 = pneg %p38
        $region26: #{tpu_custom_call.1} parent=23 // pred_check_branch
          %105 = sbr.rel (%p103) target = $region28
        $region27: #{tpu_custom_call.1} parent=23 // pred_region
          %106 = dma.done [#allocation7], 256
        $region28: #{tpu_custom_call.1} parent=23 // pred_fallthru
          _
        %p107 = pneg %p38
        %p108 = pneg %p35
        %p109 = pneg %p64
        %p110 = pneg %p61
        %s111 = sand.u32 %s51, 1
        %s112 = scalar_lea.sflag [#allocation8], %s111
        %s113 = sand.u32 %s51, 1
        %s114 = smul.addr %s113, 16
        %s115 = scalar_lea.vmem [#allocation9], %s114
        %s116 = smul.u32 2, %s22
        %s117 = smul.u32 %s22, 16
        %s118 = sld [smem:[#allocation5 + %s117]]
        %p119 = scmp.gt.s32.totalorder %s118, 0
        %s120 = scalar_select %p119, %s118, 0
        %p121 = scmp.lt.s32.totalorder %s120, 31
        %s122 = scalar_select %p121, %s120, 31
        %s123 = smul.addr %s122, 16
        %s124 = scalar_lea.hbm %s1, %s123
        // Predicated region
        $region29: #{tpu_custom_call.1} parent=23 // pred_check
          _
        $region30: #{tpu_custom_call.1} parent=23 // pred_check_branch
          %126 = sbr.rel target = $region32
        $region31: #{tpu_custom_call.1} parent=23 // pred_region
          %127 = sst [smem:[#allocation12]] [#allocation11]
          %128 = sst [smem:[#allocation13]] [#allocation10]
        $region32: #{tpu_custom_call.1} parent=23 // pred_fallthru
          _
        %130 = shalt.err (0)
        %s132 = sshll.u32 [#allocation2], 4
        %s133 = int_to_ptr.vmem [resolvable:$true] %s132
        %135 = dma.hbm_to_vmem [thread:$0]  %s124, 16, %s133, [#allocation3]
        %s136 = sadd.s32 %s117, 1
        %s137 = sld [smem:[#allocation5 + %s136]]
        %p138 = scmp.gt.s32.totalorder %s137, 0
        %s139 = scalar_select %p138, %s137, 0
        %p140 = scmp.lt.s32.totalorder %s139, 31
        %s141 = scalar_select %p140, %s139, 31
        %s142 = smul.addr %s141, 16
        %s143 = scalar_lea.hbm %s1, %s142
        %s144 = scalar_lea.vmem [#allocation2], 1
        %s145 = scalar_lea.sflag [#allocation3], 1
        // Predicated region
        $region33: #{tpu_custom_call.1} parent=23 // pred_check
          _
        $region34: #{tpu_custom_call.1} parent=23 // pred_check_branch
          %147 = sbr.rel target = $region36
        $region35: #{tpu_custom_call.1} parent=23 // pred_region
          %148 = sst [smem:[#allocation12]] [#allocation15]
          %149 = sst [smem:[#allocation13]] [#allocation14]
        $region36: #{tpu_custom_call.1} parent=23 // pred_fallthru
          _
        %151 = shalt.err (0)
        %s153 = sshll.u32 %s144, 4
        %s154 = int_to_ptr.vmem [resolvable:$true] %s153
        %156 = dma.hbm_to_vmem [thread:$0]  %s143, 16, %s154, %s145
        %s157 = sadd.s32 %s117, 2
        %s158 = sld [smem:[#allocation5 + %s157]]
        %p159 = scmp.gt.s32.totalorder %s158, 0
        %s160 = scalar_select %p159, %s158, 0
        %p161 = scmp.lt.s32.totalorder %s160, 31
        %s162 = scalar_select %p161, %s160, 31
        %s163 = smul.addr %s162, 16
        %s164 = scalar_lea.hbm %s1, %s163
        %s165 = scalar_lea.vmem [#allocation2], 2
        %s166 = scalar_lea.sflag [#allocation3], 2
        // Predicated region
        $region37: #{tpu_custom_call.1} parent=23 // pred_check
          _
        $region38: #{tpu_custom_call.1} parent=23 // pred_check_branch
          %168 = sbr.rel target = $region40
        $region39: #{tpu_custom_call.1} parent=23 // pred_region
          %169 = sst [smem:[#allocation12]] [#allocation17]
          %170 = sst [smem:[#allocation13]] [#allocation16]
        $region40: #{tpu_custom_call.1} parent=23 // pred_fallthru
          _
        %172 = shalt.err (0)
        %s174 = sshll.u32 %s165, 4
        %s175 = int_to_ptr.vmem [resolvable:$true] %s174
        %177 = dma.hbm_to_vmem [thread:$0]  %s164, 16, %s175, %s166
        %s178 = sadd.s32 %s117, 3
        %s179 = sld [smem:[#allocation5 + %s178]]
        %p180 = scmp.gt.s32.totalorder %s179, 0
        %s181 = scalar_select %p180, %s179, 0
        %p182 = scmp.lt.s32.totalorder %s181, 31
        %s183 = scalar_select %p182, %s181, 31
        %s184 = smul.addr %s183, 16
        %s185 = scalar_lea.hbm %s1, %s184
        %s186 = scalar_lea.vmem [#allocation2], 3
        %s187 = scalar_lea.sflag [#allocation3], 3
        // Predicated region
        $region41: #{tpu_custom_call.1} parent=23 // pred_check
          _
        $region42: #{tpu_custom_call.1} parent=23 // pred_check_branch
          %189 = sbr.rel target = $region44
        $region43: #{tpu_custom_call.1} parent=23 // pred_region
          %190 = sst [smem:[#allocation12]] [#allocation19]
          %191 = sst [smem:[#allocation13]] [#allocation18]
        $region44: #{tpu_custom_call.1} parent=23 // pred_fallthru
          _
        %193 = shalt.err (0)
        %s195 = sshll.u32 %s186, 4
        %s196 = int_to_ptr.vmem [resolvable:$true] %s195
        %198 = dma.hbm_to_vmem [thread:$0]  %s185, 16, %s196, %s187
        %s199 = sadd.s32 %s117, 4
        %s200 = sld [smem:[#allocation5 + %s199]]
        %p201 = scmp.gt.s32.totalorder %s200, 0
        %s202 = scalar_select %p201, %s200, 0
        %p203 = scmp.lt.s32.totalorder %s202, 31
        %s204 = scalar_select %p203, %s202, 31
        %s205 = smul.addr %s204, 16
        %s206 = scalar_lea.hbm %s1, %s205
        %s207 = scalar_lea.vmem [#allocation2], 4
        %s208 = scalar_lea.sflag [#allocation3], 4
        // Predicated region
        $region45: #{tpu_custom_call.1} parent=23 // pred_check
          _
        $region46: #{tpu_custom_call.1} parent=23 // pred_check_branch
          %210 = sbr.rel target = $region48
        $region47: #{tpu_custom_call.1} parent=23 // pred_region
          %211 = sst [smem:[#allocation12]] [#allocation21]
          %212 = sst [smem:[#allocation13]] [#allocation20]
        $region48: #{tpu_custom_call.1} parent=23 // pred_fallthru
          _
        %214 = shalt.err (0)
        %s216 = sshll.u32 %s207, 4
        %s217 = int_to_ptr.vmem [resolvable:$true] %s216
        %219 = dma.hbm_to_vmem [thread:$0]  %s206, 16, %s217, %s208
        %s220 = sadd.s32 %s117, 5
        %s221 = sld [smem:[#allocation5 + %s220]]
        %p222 = scmp.gt.s32.totalorder %s221, 0
        %s223 = scalar_select %p222, %s221, 0
        %p224 = scmp.lt.s32.totalorder %s223, 31
        %s225 = scalar_select %p224, %s223, 31
        %s226 = smul.addr %s225, 16
        %s227 = scalar_lea.hbm %s1, %s226
        %s228 = scalar_lea.vmem [#allocation2], 5
        %s229 = scalar_lea.sflag [#allocation3], 5
        // Predicated region
        $region49: #{tpu_custom_call.1} parent=23 // pred_check
          _
        $region50: #{tpu_custom_call.1} parent=23 // pred_check_branch
          %231 = sbr.rel target = $region52
        $region51: #{tpu_custom_call.1} parent=23 // pred_region
          %232 = sst [smem:[#allocation12]] [#allocation23]
          %233 = sst [smem:[#allocation13]] [#allocation22]
        $region52: #{tpu_custom_call.1} parent=23 // pred_fallthru
          _
        %235 = shalt.err (0)
        %s237 = sshll.u32 %s228, 4
        %s238 = int_to_ptr.vmem [resolvable:$true] %s237
        %240 = dma.hbm_to_vmem [thread:$0]  %s227, 16, %s238, %s229
        %s241 = sadd.s32 %s117, 6
        %s242 = sld [smem:[#allocation5 + %s241]]
        %p243 = scmp.gt.s32.totalorder %s242, 0
        %s244 = scalar_select %p243, %s242, 0
        %p245 = scmp.lt.s32.totalorder %s244, 31
        %s246 = scalar_select %p245, %s244, 31
        %s247 = smul.addr %s246, 16
        %s248 = scalar_lea.hbm %s1, %s247
        %s249 = scalar_lea.vmem [#allocation2], 6
        %s250 = scalar_lea.sflag [#allocation3], 6
        // Predicated region
        $region53: #{tpu_custom_call.1} parent=23 // pred_check
          _
        $region54: #{tpu_custom_call.1} parent=23 // pred_check_branch
          %252 = sbr.rel target = $region56
        $region55: #{tpu_custom_call.1} parent=23 // pred_region
          %253 = sst [smem:[#allocation12]] [#allocation25]
          %254 = sst [smem:[#allocation13]] [#allocation24]
        $region56: #{tpu_custom_call.1} parent=23 // pred_fallthru
          _
        %256 = shalt.err (0)
        %s258 = sshll.u32 %s249, 4
        %s259 = int_to_ptr.vmem [resolvable:$true] %s258
        %261 = dma.hbm_to_vmem [thread:$0]  %s248, 16, %s259, %s250
        %s262 = sadd.s32 %s117, 7
        %s263 = sld [smem:[#allocation5 + %s262]]
        %p264 = scmp.gt.s32.totalorder %s263, 0
        %s265 = scalar_select %p264, %s263, 0
        %p266 = scmp.lt.s32.totalorder %s265, 31
        %s267 = scalar_select %p266, %s265, 31
        %s268 = smul.addr %s267, 16
        %s269 = scalar_lea.hbm %s1, %s268
        %s270 = scalar_lea.vmem [#allocation2], 7
        %s271 = scalar_lea.sflag [#allocation3], 7
        // Predicated region
        $region57: #{tpu_custom_call.1} parent=23 // pred_check
          _
        $region58: #{tpu_custom_call.1} parent=23 // pred_check_branch
          %273 = sbr.rel target = $region60
        $region59: #{tpu_custom_call.1} parent=23 // pred_region
          %274 = sst [smem:[#allocation12]] [#allocation27]
          %275 = sst [smem:[#allocation13]] [#allocation26]
        $region60: #{tpu_custom_call.1} parent=23 // pred_fallthru
          _
        %277 = shalt.err (0)
        %s279 = sshll.u32 %s270, 4
        %s280 = int_to_ptr.vmem [resolvable:$true] %s279
        %282 = dma.hbm_to_vmem [thread:$0]  %s269, 16, %s280, %s271
        %s283 = sadd.s32 %s117, 8
        %s284 = sld [smem:[#allocation5 + %s283]]
        %p285 = scmp.gt.s32.totalorder %s284, 0
        %s286 = scalar_select %p285, %s284, 0
        %p287 = scmp.lt.s32.totalorder %s286, 31
        %s288 = scalar_select %p287, %s286, 31
        %s289 = smul.addr %s288, 16
        %s290 = scalar_lea.hbm %s1, %s289
        %s291 = scalar_lea.vmem [#allocation2], 8
        %s292 = scalar_lea.sflag [#allocation3], 8
        // Predicated region
        $region61: #{tpu_custom_call.1} parent=23 // pred_check
          _
        $region62: #{tpu_custom_call.1} parent=23 // pred_check_branch
          %294 = sbr.rel target = $region64
        $region63: #{tpu_custom_call.1} parent=23 // pred_region
          %295 = sst [smem:[#allocation12]] [#allocation29]
          %296 = sst [smem:[#allocation13]] [#allocation28]
        $region64: #{tpu_custom_call.1} parent=23 // pred_fallthru
          _
        %298 = shalt.err (0)
        %s300 = sshll.u32 %s291, 4
        %s301 = int_to_ptr.vmem [resolvable:$true] %s300
        %303 = dma.hbm_to_vmem [thread:$0]  %s290, 16, %s301, %s292
        %s304 = sadd.s32 %s117, 9
        %s305 = sld [smem:[#allocation5 + %s304]]
        %p306 = scmp.gt.s32.totalorder %s305, 0
        %s307 = scalar_select %p306, %s305, 0
        %p308 = scmp.lt.s32.totalorder %s307, 31
        %s309 = scalar_select %p308, %s307, 31
        %s310 = smul.addr %s309, 16
        %s311 = scalar_lea.hbm %s1, %s310
        %s312 = scalar_lea.vmem [#allocation2], 9
        %s313 = scalar_lea.sflag [#allocation3], 9
        // Predicated region
        $region65: #{tpu_custom_call.1} parent=23 // pred_check
          _
        $region66: #{tpu_custom_call.1} parent=23 // pred_check_branch
          %315 = sbr.rel target = $region68
        $region67: #{tpu_custom_call.1} parent=23 // pred_region
          %316 = sst [smem:[#allocation12]] [#allocation31]
          %317 = sst [smem:[#allocation13]] [#allocation30]
        $region68: #{tpu_custom_call.1} parent=23 // pred_fallthru
          _
        %319 = shalt.err (0)
        %s321 = sshll.u32 %s312, 4
        %s322 = int_to_ptr.vmem [resolvable:$true] %s321
        %324 = dma.hbm_to_vmem [thread:$0]  %s311, 16, %s322, %s313
        %s325 = sadd.s32 %s117, 10
        %s326 = sld [smem:[#allocation5 + %s325]]
        %p327 = scmp.gt.s32.totalorder %s326, 0
        %s328 = scalar_select %p327, %s326, 0
        %p329 = scmp.lt.s32.totalorder %s328, 31
        %s330 = scalar_select %p329, %s328, 31
        %s331 = smul.addr %s330, 16
        %s332 = scalar_lea.hbm %s1, %s331
        %s333 = scalar_lea.vmem [#allocation2], 10
        %s334 = scalar_lea.sflag [#allocation3], 10
        // Predicated region
        $region69: #{tpu_custom_call.1} parent=23 // pred_check
          _
        $region70: #{tpu_custom_call.1} parent=23 // pred_check_branch
          %336 = sbr.rel target = $region72
        $region71: #{tpu_custom_call.1} parent=23 // pred_region
          %337 = sst [smem:[#allocation12]] [#allocation33]
          %338 = sst [smem:[#allocation13]] [#allocation32]
        $region72: #{tpu_custom_call.1} parent=23 // pred_fallthru
          _
        %340 = shalt.err (0)
        %s342 = sshll.u32 %s333, 4
        %s343 = int_to_ptr.vmem [resolvable:$true] %s342
        %345 = dma.hbm_to_vmem [thread:$0]  %s332, 16, %s343, %s334
        %s346 = sadd.s32 %s117, 11
        %s347 = sld [smem:[#allocation5 + %s346]]
        %p348 = scmp.gt.s32.totalorder %s347, 0
        %s349 = scalar_select %p348, %s347, 0
        %p350 = scmp.lt.s32.totalorder %s349, 31
        %s351 = scalar_select %p350, %s349, 31
        %s352 = smul.addr %s351, 16
        %s353 = scalar_lea.hbm %s1, %s352
        %s354 = scalar_lea.vmem [#allocation2], 11
        %s355 = scalar_lea.sflag [#allocation3], 11
        // Predicated region
        $region73: #{tpu_custom_call.1} parent=23 // pred_check
          _
        $region74: #{tpu_custom_call.1} parent=23 // pred_check_branch
          %357 = sbr.rel target = $region76
        $region75: #{tpu_custom_call.1} parent=23 // pred_region
          %358 = sst [smem:[#allocation12]] [#allocation35]
          %359 = sst [smem:[#allocation13]] [#allocation34]
        $region76: #{tpu_custom_call.1} parent=23 // pred_fallthru
          _
        %361 = shalt.err (0)
        %s363 = sshll.u32 %s354, 4
        %s364 = int_to_ptr.vmem [resolvable:$true] %s363
        %366 = dma.hbm_to_vmem [thread:$0]  %s353, 16, %s364, %s355
        %s367 = sadd.s32 %s117, 12
        %s368 = sld [smem:[#allocation5 + %s367]]
        %p369 = scmp.gt.s32.totalorder %s368, 0
        %s370 = scalar_select %p369, %s368, 0
        %p371 = scmp.lt.s32.totalorder %s370, 31
        %s372 = scalar_select %p371, %s370, 31
        %s373 = smul.addr %s372, 16
        %s374 = scalar_lea.hbm %s1, %s373
        %s375 = scalar_lea.vmem [#allocation2], 12
        %s376 = scalar_lea.sflag [#allocation3], 12
        // Predicated region
        $region77: #{tpu_custom_call.1} parent=23 // pred_check
          _
        $region78: #{tpu_custom_call.1} parent=23 // pred_check_branch
          %378 = sbr.rel target = $region80
        $region79: #{tpu_custom_call.1} parent=23 // pred_region
          %379 = sst [smem:[#allocation12]] [#allocation37]
          %380 = sst [smem:[#allocation13]] [#allocation36]
        $region80: #{tpu_custom_call.1} parent=23 // pred_fallthru
          _
        %382 = shalt.err (0)
        %s384 = sshll.u32 %s375, 4
        %s385 = int_to_ptr.vmem [resolvable:$true] %s384
        %387 = dma.hbm_to_vmem [thread:$0]  %s374, 16, %s385, %s376
        %s388 = sadd.s32 %s117, 13
        %s389 = sld [smem:[#allocation5 + %s388]]
        %p390 = scmp.gt.s32.totalorder %s389, 0
        %s391 = scalar_select %p390, %s389, 0
        %p392 = scmp.lt.s32.totalorder %s391, 31
        %s393 = scalar_select %p392, %s391, 31
        %s394 = smul.addr %s393, 16
        %s395 = scalar_lea.hbm %s1, %s394
        %s396 = scalar_lea.vmem [#allocation2], 13
        %s397 = scalar_lea.sflag [#allocation3], 13
        // Predicated region
        $region81: #{tpu_custom_call.1} parent=23 // pred_check
          _
        $region82: #{tpu_custom_call.1} parent=23 // pred_check_branch
          %399 = sbr.rel target = $region84
        $region83: #{tpu_custom_call.1} parent=23 // pred_region
          %400 = sst [smem:[#allocation12]] [#allocation39]
          %401 = sst [smem:[#allocation13]] [#allocation38]
        $region84: #{tpu_custom_call.1} parent=23 // pred_fallthru
          _
        %403 = shalt.err (0)
        %s405 = sshll.u32 %s396, 4
        %s406 = int_to_ptr.vmem [resolvable:$true] %s405
        %408 = dma.hbm_to_vmem [thread:$0]  %s395, 16, %s406, %s397
        %s409 = sadd.s32 %s117, 14
        %s410 = sld [smem:[#allocation5 + %s409]]
        %p411 = scmp.gt.s32.totalorder %s410, 0
        %s412 = scalar_select %p411, %s410, 0
        %p413 = scmp.lt.s32.totalorder %s412, 31
        %s414 = scalar_select %p413, %s412, 31
        %s415 = smul.addr %s414, 16
        %s416 = scalar_lea.hbm %s1, %s415
        %s417 = scalar_lea.vmem [#allocation2], 14
        %s418 = scalar_lea.sflag [#allocation3], 14
        // Predicated region
        $region85: #{tpu_custom_call.1} parent=23 // pred_check
          _
        $region86: #{tpu_custom_call.1} parent=23 // pred_check_branch
          %420 = sbr.rel target = $region88
        $region87: #{tpu_custom_call.1} parent=23 // pred_region
          %421 = sst [smem:[#allocation12]] [#allocation41]
          %422 = sst [smem:[#allocation13]] [#allocation40]
        $region88: #{tpu_custom_call.1} parent=23 // pred_fallthru
          _
        %424 = shalt.err (0)
        %s426 = sshll.u32 %s417, 4
        %s427 = int_to_ptr.vmem [resolvable:$true] %s426
        %429 = dma.hbm_to_vmem [thread:$0]  %s416, 16, %s427, %s418
        %s430 = sadd.s32 %s117, 15
        %s431 = sld [smem:[#allocation5 + %s430]]
        %p432 = scmp.gt.s32.totalorder %s431, 0
        %s433 = scalar_select %p432, %s431, 0
        %p434 = scmp.lt.s32.totalorder %s433, 31
        %s435 = scalar_select %p434, %s433, 31
        %s436 = smul.addr %s435, 16
        %s437 = scalar_lea.hbm %s1, %s436
        %s438 = scalar_lea.vmem [#allocation2], 15
        %s439 = scalar_lea.sflag [#allocation3], 15
        // Predicated region
        $region89: #{tpu_custom_call.1} parent=23 // pred_check
          _
        $region90: #{tpu_custom_call.1} parent=23 // pred_check_branch
          %441 = sbr.rel target = $region92
        $region91: #{tpu_custom_call.1} parent=23 // pred_region
          %442 = sst [smem:[#allocation12]] [#allocation43]
          %443 = sst [smem:[#allocation13]] [#allocation42]
        $region92: #{tpu_custom_call.1} parent=23 // pred_fallthru
          _
        %445 = shalt.err (0)
        %s447 = sshll.u32 %s438, 4
        %s448 = int_to_ptr.vmem [resolvable:$true] %s447
        %450 = dma.hbm_to_vmem [thread:$0]  %s437, 16, %s448, %s439
        %s451 = sld [smem:[#allocation5 + %s117]]
        %s452 = smul.u32 1, 1
        %s453 = sshll.u32 %s452, 4
        %454 = dma.done [#allocation3], %s453
        %s455 = sld [smem:[#allocation5 + %s136]]
        %s456 = sshll.u32 %s452, 4
        %457 = dma.done %s145, %s456
        %s458 = sld [smem:[#allocation5 + %s157]]
        %s459 = sshll.u32 %s452, 4
        %460 = dma.done %s166, %s459
        %s461 = sld [smem:[#allocation5 + %s178]]
        %s462 = sshll.u32 %s452, 4
        %463 = dma.done %s187, %s462
        %s464 = sld [smem:[#allocation5 + %s199]]
        %s465 = sshll.u32 %s452, 4
        %466 = dma.done %s208, %s465
        %s467 = sld [smem:[#allocation5 + %s220]]
        %s468 = sshll.u32 %s452, 4
        %469 = dma.done %s229, %s468
        %s470 = sld [smem:[#allocation5 + %s241]]
        %s471 = sshll.u32 %s452, 4
        %472 = dma.done %s250, %s471
        %s473 = sld [smem:[#allocation5 + %s262]]
        %s474 = sshll.u32 %s452, 4
        %475 = dma.done %s271, %s474
        %s476 = sld [smem:[#allocation5 + %s283]]
        %s477 = sshll.u32 %s452, 4
        %478 = dma.done %s292, %s477
        %s479 = sld [smem:[#allocation5 + %s304]]
        %s480 = sshll.u32 %s452, 4
        %481 = dma.done %s313, %s480
        %s482 = sld [smem:[#allocation5 + %s325]]
        %s483 = sshll.u32 %s452, 4
        %484 = dma.done %s334, %s483
        %s485 = sld [smem:[#allocation5 + %s346]]
        %s486 = sshll.u32 %s452, 4
        %487 = dma.done %s355, %s486
        %s488 = sld [smem:[#allocation5 + %s367]]
        %s489 = sshll.u32 %s452, 4
        %490 = dma.done %s376, %s489
        %s491 = sld [smem:[#allocation5 + %s388]]
        %s492 = sshll.u32 %s452, 4
        %493 = dma.done %s397, %s492
        %s494 = sld [smem:[#allocation5 + %s409]]
        %s495 = sshll.u32 %s452, 4
        %496 = dma.done %s418, %s495
        %s497 = sld [smem:[#allocation5 + %s430]]
        %s498 = sshll.u32 %s452, 4
        %499 = dma.done %s439, %s498
        %v500 = vld [vmem:[#allocation2] sm:$0xff]
        %v501 = vld [vmem:[#allocation2 + $0x8] sm:$0xff]
        %v502 = vld [vmem:[#allocation6] sm:$0xff]
        %v503 = vld [vmem:[#allocation6 + $0x8] sm:$0xff]
        %v504 = vadd.f32 %v500, %v502
        %v505 = vadd.f32 %v501, %v503
        %506 = vst [vmem:[%s115] sm:$0xff] %v504
        %507 = vst [vmem:[%s115 + $0x8] sm:$0xff] %v505
        %s508 = sand.u32 %s51, 1
        %s509 = scalar_lea.sflag [#allocation8], %s508
        %s510 = sand.u32 %s51, 1
        %s511 = smul.addr %s510, 16
        %s512 = scalar_lea.vmem [#allocation9], %s511
        // Predicated region
        $region93: #{tpu_custom_call.1} parent=23 // pred_check
          %p513 = pneg %p61
        $region94: #{tpu_custom_call.1} parent=23 // pred_check_branch
          %515 = sbr.rel (%p513) target = $region96
        $region95: #{tpu_custom_call.1} parent=23 // pred_region
          %s516 = smul.u32 2, %s22
          %s518 = ssub.s32 256, 256
          %519 = vsyncadd %s509, %s518
          %s520 = smul.addr %s516, 128
          %s521 = scalar_lea.hbm %s3, %s520
          %s522 = sshll.u32 %s512, 4
          %s523 = int_to_ptr.vmem [resolvable:$true] %s522
          %528 = dma.vmem_to_hbm [thread:$0]  %s523, 256, %s521, %s509, 128, 128, 8
        $region96: #{tpu_custom_call.1} parent=23 // pred_fallthru
          _
      $region24: #{tpu_custom_call.1} parent=5 // pred_fallthru
        _
      %p529 = scmp.le.s32.totalorder 2, %s17
      // Predicated region
      $region97: #{tpu_custom_call.1} parent=5 // pred_check
        %p530 = pneg %p529
      $region98: #{tpu_custom_call.1} parent=5 // pred_check_branch
        %532 = sbr.rel (%p530) target = $region100
      $region99: #{tpu_custom_call.1} parent=5 // pred_region
        %s533 = ssub.s32 %s17, 2
        // Predicated region
        $region101: #{tpu_custom_call.1} parent=99 // pred_check
          %p534 = pneg %p67
        $region102: #{tpu_custom_call.1} parent=99 // pred_check_branch
          %536 = sbr.rel (%p534) target = $region104
        $region103: #{tpu_custom_call.1} parent=99 // pred_region
          %s537 = sand.u32 %s52, 1
          %s538 = scalar_lea.sflag [#allocation8], %s537
          %s539 = sand.u32 %s52, 1
          %s540 = smul.addr %s539, 16
          %s541 = scalar_lea.vmem [#allocation9], %s540
          %542 = dma.done %s538, 256
        $region104: #{tpu_custom_call.1} parent=99 // pred_fallthru
          _
      $region100: #{tpu_custom_call.1} parent=5 // pred_fallthru
        _
    $region6: #{tpu_custom_call.1} parent=1 // loop_footer
      %s21 = sadd.s32 1, %s17
    $region7: #{tpu_custom_call.1} parent=1 // loop_footer_branch
      %16 = sbr.rel target = $region3
    $region8: #{tpu_custom_call.1} parent=1 // loop_exit
      _
    %543 = vsyncpa [#allocation7], 1
    %s544 = scalar_lea.sflag [#allocation7], 1
    %545 = vsyncpa %s544, 1
    %546 = vsyncpa [#allocation8], 1
    %s547 = scalar_lea.sflag [#allocation8], 1
    %548 = vsyncpa %s547, 1
  %549 = vsyncmov [#allocation3]
  %s550 = vpop.sfrf %549
  %p551 = scmp.eq.s32.totalorder %s550, 0
  %p552 = pneg %p551
  %554 = shalt.err (%p552)
  %s555 = scalar_lea.sflag [#allocation3], 1
  %556 = vsyncmov %s555
  %s557 = vpop.sfrf %556
  %p558 = scmp.eq.s32.totalorder %s557, 0
  %p559 = pneg %p558
  %561 = shalt.err (%p559)
  %s562 = scalar_lea.sflag [#allocation3], 2
  %563 = vsyncmov %s562
  %s564 = vpop.sfrf %563
  %p565 = scmp.eq.s32.totalorder %s564, 0
  %p566 = pneg %p565
  %568 = shalt.err (%p566)
  %s569 = scalar_lea.sflag [#allocation3], 3
  %570 = vsyncmov %s569
  %s571 = vpop.sfrf %570
  %p572 = scmp.eq.s32.totalorder %s571, 0
  %p573 = pneg %p572
  %575 = shalt.err (%p573)
  %s576 = scalar_lea.sflag [#allocation3], 4
  %577 = vsyncmov %s576
  %s578 = vpop.sfrf %577
  %p579 = scmp.eq.s32.totalorder %s578, 0
  %p580 = pneg %p579
  %582 = shalt.err (%p580)
  %s583 = scalar_lea.sflag [#allocation3], 5
  %584 = vsyncmov %s583
  %s585 = vpop.sfrf %584
  %p586 = scmp.eq.s32.totalorder %s585, 0
  %p587 = pneg %p586
  %589 = shalt.err (%p587)
  %s590 = scalar_lea.sflag [#allocation3], 6
  %591 = vsyncmov %s590
  %s592 = vpop.sfrf %591
  %p593 = scmp.eq.s32.totalorder %s592, 0
  %p594 = pneg %p593
  %596 = shalt.err (%p594)
  %s597 = scalar_lea.sflag [#allocation3], 7
  %598 = vsyncmov %s597
  %s599 = vpop.sfrf %598
  %p600 = scmp.eq.s32.totalorder %s599, 0
  %p601 = pneg %p600
  %603 = shalt.err (%p601)
  %s604 = scalar_lea.sflag [#allocation3], 8
  %605 = vsyncmov %s604
  %s606 = vpop.sfrf %605
  %p607 = scmp.eq.s32.totalorder %s606, 0
  %p608 = pneg %p607
  %610 = shalt.err (%p608)
  %s611 = scalar_lea.sflag [#allocation3], 9
  %612 = vsyncmov %s611
  %s613 = vpop.sfrf %612
  %p614 = scmp.eq.s32.totalorder %s613, 0
  %p615 = pneg %p614
  %617 = shalt.err (%p615)
  %s618 = scalar_lea.sflag [#allocation3], 10
  %619 = vsyncmov %s618
  %s620 = vpop.sfrf %619
  %p621 = scmp.eq.s32.totalorder %s620, 0
  %p622 = pneg %p621
  %624 = shalt.err (%p622)
  %s625 = scalar_lea.sflag [#allocation3], 11
  %626 = vsyncmov %s625
  %s627 = vpop.sfrf %626
  %p628 = scmp.eq.s32.totalorder %s627, 0
  %p629 = pneg %p628
  %631 = shalt.err (%p629)
  %s632 = scalar_lea.sflag [#allocation3], 12
  %633 = vsyncmov %s632
  %s634 = vpop.sfrf %633
  %p635 = scmp.eq.s32.totalorder %s634, 0
  %p636 = pneg %p635
  %638 = shalt.err (%p636)
  %s639 = scalar_lea.sflag [#allocation3], 13
  %640 = vsyncmov %s639
  %s641 = vpop.sfrf %640
  %p642 = scmp.eq.s32.totalorder %s641, 0
  %p643 = pneg %p642
  %645 = shalt.err (%p643)
  %s646 = scalar_lea.sflag [#allocation3], 14
  %647 = vsyncmov %s646
  %s648 = vpop.sfrf %647
  %p649 = scmp.eq.s32.totalorder %s648, 0
  %p650 = pneg %p649
  %652 = shalt.err (%p650)
  %s653 = scalar_lea.sflag [#allocation3], 15
  %654 = vsyncmov %s653
  %s655 = vpop.sfrf %654
  %p656 = scmp.eq.s32.totalorder %s655, 0
  %p657 = pneg %p656
  %659 = shalt.err (%p657)

</llo_original>
